<compile_context>
chip_gen: v6e
topology: v6e:2x2x1
jax: 0.10.0
libtpu: 0.0.40
codegen_flags: <defaults>
</compile_context>

<pallas_src>
import functools

import jax
import jax.numpy as jnp
from jax.experimental import pallas as pl
from jax.experimental.pallas import tpu as pltpu


def _round_up(v, m):
    return ((v + m - 1) // m) * m


def _gnn_kernel(adj_ref, x_ref, w1_ref, b1_ref, batch_ref, w2_ref, b2_ref,
                out_ref, pooled_ref, *, adj_x_first, num_graphs_padded):
    i = pl.program_id(0)

    # ---- init the per-graph running-max accumulator on the first block -----
    @pl.when(i == 0)
    def _init():
        pooled_ref[...] = jnp.zeros_like(pooled_ref)

    # ---- GCNConv for this row block: A_hat_blk @ X @ W1 + b1, ReLU ---------
    adj_blk = adj_ref[...]                                   # (tm, Np) bf16
    if adj_x_first:
        # in_channels <= hidden: contract the N x N matmul over the small
        # channel dim (hidden/in times fewer MXU flops).
        ax = jnp.dot(adj_blk, x_ref[...],
                     preferred_element_type=jnp.float32)      # (tm, Cin)
        h = jnp.dot(ax.astype(jnp.bfloat16), w1_ref[...],
                    preferred_element_type=jnp.float32)       # (tm, Hp)
    else:
        # in_channels > hidden: project to hidden first.
        # (x @ w1 is recomputed per row block; cheap vs. the NxN propagation.)
        xw = jnp.dot(x_ref[...], w1_ref[...],
                     preferred_element_type=jnp.float32)
        h = jnp.dot(adj_blk, xw.astype(jnp.bfloat16),
                    preferred_element_type=jnp.float32)       # (tm, Hp)
    h = jnp.maximum(h + b1_ref[...], 0.0)                     # ReLU, f32

    # ---- global_max_pool: per-graph running max over row blocks ------------
    # h >= 0 after ReLU, so masking with the 0/1 membership mask by
    # multiplication is exact (no -inf constant, no compare+select).
    batch_ids = batch_ref[...]                                # (tm, 1) int32
    for g in range(num_graphs_padded):        # static unroll; G is small here
        m_g = (batch_ids == g).astype(h.dtype)                # (tm, 1)
        row = jnp.max(h * m_g, axis=0, keepdims=True)         # (1, Hp)
        pooled_ref[g:g + 1, :] = jnp.maximum(pooled_ref[g:g + 1, :], row)
    # TODO(synk): for large graph counts (G ~ 64-128) switch the static unroll
    # to a lax.fori_loop / segment-max formulation.

    # ---- final Linear on the last block -------------------------------------
    @pl.when(i == pl.num_programs(0) - 1)
    def _finalize():
        out_ref[...] = (
            jnp.dot(pooled_ref[...], w2_ref[...],
                    preferred_element_type=jnp.float32)
            + b2_ref[...])


def gnn_fakenews_forward(x, edge_index, batch, params, num_graphs, *,
                         block_rows=128):
    """x: (N, in) f32, edge_index: (2, E) int32, batch: (N,) int32."""
    w1, b1, w2, b2 = params
    n = x.shape[0]
    in_ch = x.shape[1]
    hidden = w1.shape[1]
    out_ch = w2.shape[1]

    # ---- padded / tiled sizes (lane-dense: multiples of 128 on lane dims) --
    n_p = _round_up(n, 128)
    h_p = _round_up(hidden, 128)
    o_p = _round_up(out_ch, 128)
    g_p = _round_up(max(num_graphs, 1), 8)
    tm = min(block_rows, n_p)
    assert n_p % tm == 0
    n_blocks = n_p // tm

    # ---- glue: dense normalized adjacency with self loops (GCN norm) -------
    # TODO(synk): for production sizes (E << N^2) replace the dense adjacency
    # with a CSR / scalar-prefetch gather formulation inside the kernel.
    src = edge_index[0]
    dst = edge_index[1]
    loop = jnp.arange(n, dtype=src.dtype)
    src = jnp.concatenate([src, loop])
    dst = jnp.concatenate([dst, loop])
    deg = jnp.zeros((n,), jnp.float32).at[dst].add(1.0)
    dinv = jnp.where(deg > 0, jax.lax.rsqrt(deg), 0.0)
    norm = dinv[dst] * dinv[src]
    adj = jnp.zeros((n_p, n_p), jnp.float32).at[dst, src].add(norm)
    adj = adj.astype(jnp.bfloat16)                 # bf16 MXU operand

    # ---- padded operands ----------------------------------------------------
    x_p = jnp.zeros((n_p, in_ch), jnp.bfloat16).at[:n, :].set(
        x.astype(jnp.bfloat16))
    w1_p = jnp.zeros((in_ch, h_p), jnp.bfloat16).at[:, :hidden].set(
        w1.astype(jnp.bfloat16))
    b1_p = jnp.zeros((1, h_p), jnp.float32).at[0, :hidden].set(b1)
    w2_p = jnp.zeros((h_p, o_p), jnp.float32).at[:hidden, :out_ch].set(w2)
    b2_p = jnp.zeros((1, o_p), jnp.float32).at[0, :out_ch].set(b2)
    # Padded nodes get graph id g_p (never matched) so relu(b1) rows from the
    # zero-padding can never pollute the per-graph max.
    batch_p = jnp.full((n_p, 1), g_p, jnp.int32).at[:n, 0].set(
        batch.astype(jnp.int32))

    kernel = functools.partial(
        _gnn_kernel,
        adj_x_first=bool(in_ch <= hidden),
        num_graphs_padded=g_p,
    )

    c_small = min(in_ch, h_p)
    flops = (2 * n_p * n_p * c_small + 2 * n_p * in_ch * h_p
             + 2 * g_p * h_p * o_p)
    bytes_accessed = (adj.size * 2 + x_p.size * 2 + w1_p.size * 2
                      + (b1_p.size + w2_p.size + b2_p.size) * 4
                      + batch_p.size * 4 + g_p * o_p * 4)

    out_p = pl.pallas_call(
        kernel,
        out_shape=jax.ShapeDtypeStruct((g_p, o_p), jnp.float32),
        grid_spec=pltpu.PrefetchScalarGridSpec(
            num_scalar_prefetch=0,
            grid=(n_blocks,),
            in_specs=[
                pl.BlockSpec((tm, n_p), lambda i: (i, 0)),      # adj row block
                pl.BlockSpec((n_p, in_ch), lambda i: (0, 0)),   # x (resident)
                pl.BlockSpec((in_ch, h_p), lambda i: (0, 0)),   # w1
                pl.BlockSpec((1, h_p), lambda i: (0, 0)),       # b1
                pl.BlockSpec((tm, 1), lambda i: (i, 0)),        # batch ids
                pl.BlockSpec((h_p, o_p), lambda i: (0, 0)),     # w2
                pl.BlockSpec((1, o_p), lambda i: (0, 0)),       # b2
            ],
            out_specs=pl.BlockSpec((g_p, o_p), lambda i: (0, 0)),
            scratch_shapes=[pltpu.VMEM((g_p, h_p), jnp.float32)],
        ),
        compiler_params=pltpu.CompilerParams(
            # Row-block axis is a reduction into the pooled accumulator.
            dimension_semantics=("arbitrary",),
            vmem_limit_bytes=32 * 1024 * 1024,
        ),
        cost_estimate=pl.CostEstimate(
            flops=flops, transcendentals=0, bytes_accessed=bytes_accessed),
    )(adj, x_p, w1_p, b1_p, batch_p, w2_p, b2_p)

    return out_p[:num_graphs, :out_ch]


def _reference_forward(x, edge_index, batch, params, num_graphs):
    """Plain-JAX f32 reference for correctness checking."""
    w1, b1, w2, b2 = params
    n = x.shape[0]
    src, dst = edge_index[0], edge_index[1]
    loop = jnp.arange(n, dtype=src.dtype)
    src = jnp.concatenate([src, loop])
    dst = jnp.concatenate([dst, loop])
    deg = jnp.zeros((n,), jnp.float32).at[dst].add(1.0)
    dinv = jnp.where(deg > 0, jax.lax.rsqrt(deg), 0.0)
    norm = dinv[dst] * dinv[src]
    adj = jnp.zeros((n, n), jnp.float32).at[dst, src].add(norm)
    h = jnp.maximum(adj @ (x @ w1) + b1, 0.0)
    pooled = jnp.stack([
        jnp.max(jnp.where((batch == g)[:, None], h, -jnp.inf), axis=0)
        for g in range(num_graphs)
    ])
    return pooled @ w2 + b2


if __name__ == "__main__":
    # Small, module-consistent shapes.
    N_NODES = 16          # total nodes across the batch of graphs
    IN_CH = 8             # in_channels
    HIDDEN = 32           # hidden_channels
    OUT_CH = 2            # out_channels (fake / real)
    N_EDGES = 40
    NUM_GRAPHS = 2

    key = jax.random.PRNGKey(0)
    k_x, k_e, k_w1, k_b1, k_w2, k_b2 = jax.random.split(key, 6)

    x = jax.random.normal(k_x, (N_NODES, IN_CH), dtype=jnp.float32)
    edge_index = jax.random.randint(k_e, (2, N_EDGES), 0, N_NODES,
                                    dtype=jnp.int32)
    batch = jnp.repeat(jnp.arange(NUM_GRAPHS, dtype=jnp.int32),
                       N_NODES // NUM_GRAPHS)

    # Deterministic synthetic parameters (GCNConv weight/bias + Linear).
    w1 = jax.random.normal(k_w1, (IN_CH, HIDDEN), dtype=jnp.float32) * 0.1
    b1 = jax.random.normal(k_b1, (HIDDEN,), dtype=jnp.float32) * 0.1
    w2 = jax.random.normal(k_w2, (HIDDEN, OUT_CH), dtype=jnp.float32) * 0.1
    b2 = jax.random.normal(k_b2, (OUT_CH,), dtype=jnp.float32) * 0.1
    params = (w1, b1, w2, b2)

    out = gnn_fakenews_forward(x, edge_index, batch, params, NUM_GRAPHS)
    out = jax.block_until_ready(out)

    ref = _reference_forward(x, edge_index, batch, params, NUM_GRAPHS)
    assert out.shape == (NUM_GRAPHS, OUT_CH)
    # bf16 MXU operands (f32 accumulation) -> loosened tolerance vs f32 ref.
    assert jnp.allclose(out, ref, atol=3e-2, rtol=3e-2), (out, ref)

    print("KERNEL_OK")
</pallas_src>

<mosaic_0001>
module attributes {stable_mosaic.version = 11 : i64} {
  func.func @_gnn_kernel(%arg0: i32, %arg1: memref<128x128xbf16, #tpu.memory_space<vmem>>, %arg2: memref<128x8xbf16, #tpu.memory_space<vmem>>, %arg3: memref<8x128xbf16, #tpu.memory_space<vmem>>, %arg4: memref<1x128xf32, #tpu.memory_space<vmem>>, %arg5: memref<128x1xi32, #tpu.memory_space<vmem>>, %arg6: memref<128x128xf32, #tpu.memory_space<vmem>>, %arg7: memref<1x128xf32, #tpu.memory_space<vmem>>, %arg8: memref<8x128xf32, #tpu.memory_space<vmem>>, %arg9: memref<8x128xf32, #tpu.memory_space<vmem>>) attributes {dimension_semantics = [#tpu.dimension_semantics<arbitrary>], iteration_bounds = array<i64: 1>, scalar_prefetch = 0 : i64, scratch_operands = 1 : i64, tpu.core_type = #tpu.core_type<tc>, window_params = [{transform_indices = @transform_0, window_bounds = array<i64: 128, 128>}, {pipeline_mode = #tpu.pipeline_mode<synchronous>, transform_indices = @transform_1, window_bounds = array<i64: 128, 8>}, {pipeline_mode = #tpu.pipeline_mode<synchronous>, transform_indices = @transform_2, window_bounds = array<i64: 8, 128>}, {pipeline_mode = #tpu.pipeline_mode<synchronous>, transform_indices = @transform_3, window_bounds = array<i64: 1, 128>}, {transform_indices = @transform_4, window_bounds = array<i64: 128, 1>}, {pipeline_mode = #tpu.pipeline_mode<synchronous>, transform_indices = @transform_5, window_bounds = array<i64: 128, 128>}, {pipeline_mode = #tpu.pipeline_mode<synchronous>, transform_indices = @transform_6, window_bounds = array<i64: 1, 128>}, {pipeline_mode = #tpu.pipeline_mode<synchronous>, transform_indices = @transform_7, window_bounds = array<i64: 8, 128>}]} {
    %c0_i32 = arith.constant 0 : i32
    %0 = arith.cmpi eq, %arg0, %c0_i32 : i32
    %1 = arith.extui %0 : i1 to i32
    %c0_i32_0 = arith.constant 0 : i32
    %2 = arith.cmpi ne, %1, %c0_i32_0 : i32
    scf.if %2 {
      %cst_48 = arith.constant 0.000000e+00 : f32
      %106 = vector.broadcast %cst_48 : f32 to vector<8x128xf32>
      %c0_49 = arith.constant 0 : index
      %c0_50 = arith.constant 0 : index
      %107 = vector.load %arg9[%c0_49, %c0_50] : memref<8x128xf32, #tpu.memory_space<vmem>>, vector<8x128xf32>
      tpu.vector_store %arg9[%c0_49, %c0_50], %106 {strides = array<i32>} : memref<8x128xf32, #tpu.memory_space<vmem>>, vector<8x128xf32>,
    } else {
    }
    %c0 = arith.constant 0 : index
    %c0_1 = arith.constant 0 : index
    %3 = vector.load %arg1[%c0, %c0_1] : memref<128x128xbf16, #tpu.memory_space<vmem>>, vector<128x128xbf16>
    %c0_2 = arith.constant 0 : index
    %c0_3 = arith.constant 0 : index
    %4 = vector.load %arg2[%c0_2, %c0_3] : memref<128x8xbf16, #tpu.memory_space<vmem>>, vector<128x8xbf16>
    %cst = arith.constant dense<0.000000e+00> : vector<128x8xf32>
    %5 = tpu.matmul %3, %4, %cst {dimension_numbers = #tpu.dot_dimension_numbers<[1], [0], [0], [1], [0, 0, 1, 1], [], []>} : vector<128x128xbf16>, vector<128x8xbf16>, vector<128x8xf32> -> vector<128x8xf32>
    %6 = arith.truncf %5 : vector<128x8xf32> to vector<128x8xbf16>
    %c0_4 = arith.constant 0 : index
    %c0_5 = arith.constant 0 : index
    %7 = vector.load %arg3[%c0_4, %c0_5] : memref<8x128xbf16, #tpu.memory_space<vmem>>, vector<8x128xbf16>
    %cst_6 = arith.constant dense<0.000000e+00> : vector<128x128xf32>
    %8 = tpu.matmul %6, %7, %cst_6 {dimension_numbers = #tpu.dot_dimension_numbers<[1], [0], [0], [1], [0, 0, 1, 1], [], []>} : vector<128x8xbf16>, vector<8x128xbf16>, vector<128x128xf32> -> vector<128x128xf32>
    %c0_7 = arith.constant 0 : index
    %c0_8 = arith.constant 0 : index
    %9 = vector.load %arg4[%c0_7, %c0_8] : memref<1x128xf32, #tpu.memory_space<vmem>>, vector<1x128xf32>
    %10 = vector.broadcast %9 : vector<1x128xf32> to vector<128x128xf32>
    %11 = arith.addf %8, %10 : vector<128x128xf32>
    %cst_9 = arith.constant 0.000000e+00 : f32
    %12 = vector.broadcast %cst_9 : f32 to vector<128x128xf32>
    %13 = arith.maximumf %11, %12 : vector<128x128xf32>
    %c0_10 = arith.constant 0 : index
    %c0_11 = arith.constant 0 : index
    %14 = vector.load %arg5[%c0_10, %c0_11] : memref<128x1xi32, #tpu.memory_space<vmem>>, vector<128x1xi32>
    %c0_i32_12 = arith.constant 0 : i32
    %15 = vector.broadcast %c0_i32_12 : i32 to vector<128x1xi32>
    %16 = arith.cmpi eq, %14, %15 : vector<128x1xi32>
    %17 = arith.extui %16 : vector<128x1xi1> to vector<128x1xi32>
    %18 = arith.sitofp %17 : vector<128x1xi32> to vector<128x1xf32>
    %19 = vector.broadcast %18 : vector<128x1xf32> to vector<128x128xf32>
    %20 = arith.mulf %13, %19 : vector<128x128xf32>
    %cst_13 = arith.constant dense<0xFF800000> : vector<128xf32>
    %21 = vector.multi_reduction <maximumf>, %20, %cst_13 [0] : vector<128x128xf32> to vector<128xf32>
    %22 = vector.shape_cast %21 : vector<128xf32> to vector<1x128xf32>
    %c0_14 = arith.constant 0 : index
    %c0_15 = arith.constant 0 : index
    %23 = vector.load %arg9[%c0_14, %c0_15] : memref<8x128xf32, #tpu.memory_space<vmem>>, vector<1x128xf32>
    %24 = arith.maximumf %23, %22 : vector<1x128xf32>
    %c0_16 = arith.constant 0 : index
    %c0_17 = arith.constant 0 : index
    %25 = vector.load %arg9[%c0_16, %c0_17] : memref<8x128xf32, #tpu.memory_space<vmem>>, vector<1x128xf32>
    tpu.vector_store %arg9[%c0_16, %c0_17], %24 {strides = array<i32>} : memref<8x128xf32, #tpu.memory_space<vmem>>, vector<1x128xf32>,
    %c1_i32 = arith.constant 1 : i32
    %26 = vector.broadcast %c1_i32 : i32 to vector<128x1xi32>
    %27 = arith.cmpi eq, %14, %26 : vector<128x1xi32>
    %28 = arith.extui %27 : vector<128x1xi1> to vector<128x1xi32>
    %29 = arith.sitofp %28 : vector<128x1xi32> to vector<128x1xf32>
    %30 = vector.broadcast %29 : vector<128x1xf32> to vector<128x128xf32>
    %31 = arith.mulf %13, %30 : vector<128x128xf32>
    %cst_18 = arith.constant dense<0xFF800000> : vector<128xf32>
    %32 = vector.multi_reduction <maximumf>, %31, %cst_18 [0] : vector<128x128xf32> to vector<128xf32>
    %33 = vector.shape_cast %32 : vector<128xf32> to vector<1x128xf32>
    %c1 = arith.constant 1 : index
    %c0_19 = arith.constant 0 : index
    %34 = vector.load %arg9[%c1, %c0_19] : memref<8x128xf32, #tpu.memory_space<vmem>>, vector<1x128xf32>
    %35 = arith.maximumf %34, %33 : vector<1x128xf32>
    %c1_20 = arith.constant 1 : index
    %c0_21 = arith.constant 0 : index
    %36 = vector.load %arg9[%c1_20, %c0_21] : memref<8x128xf32, #tpu.memory_space<vmem>>, vector<1x128xf32>
    tpu.vector_store %arg9[%c1_20, %c0_21], %35 {strides = array<i32>} : memref<8x128xf32, #tpu.memory_space<vmem>>, vector<1x128xf32>,
    %c2_i32 = arith.constant 2 : i32
    %37 = vector.broadcast %c2_i32 : i32 to vector<128x1xi32>
    %38 = arith.cmpi eq, %14, %37 : vector<128x1xi32>
    %39 = arith.extui %38 : vector<128x1xi1> to vector<128x1xi32>
    %40 = arith.sitofp %39 : vector<128x1xi32> to vector<128x1xf32>
    %41 = vector.broadcast %40 : vector<128x1xf32> to vector<128x128xf32>
    %42 = arith.mulf %13, %41 : vector<128x128xf32>
    %cst_22 = arith.constant dense<0xFF800000> : vector<128xf32>
    %43 = vector.multi_reduction <maximumf>, %42, %cst_22 [0] : vector<128x128xf32> to vector<128xf32>
    %44 = vector.shape_cast %43 : vector<128xf32> to vector<1x128xf32>
    %c2 = arith.constant 2 : index
    %c0_23 = arith.constant 0 : index
    %45 = vector.load %arg9[%c2, %c0_23] : memref<8x128xf32, #tpu.memory_space<vmem>>, vector<1x128xf32>
    %46 = arith.maximumf %45, %44 : vector<1x128xf32>
    %c2_24 = arith.constant 2 : index
    %c0_25 = arith.constant 0 : index
    %47 = vector.load %arg9[%c2_24, %c0_25] : memref<8x128xf32, #tpu.memory_space<vmem>>, vector<1x128xf32>
    tpu.vector_store %arg9[%c2_24, %c0_25], %46 {strides = array<i32>} : memref<8x128xf32, #tpu.memory_space<vmem>>, vector<1x128xf32>,
    %c3_i32 = arith.constant 3 : i32
    %48 = vector.broadcast %c3_i32 : i32 to vector<128x1xi32>
    %49 = arith.cmpi eq, %14, %48 : vector<128x1xi32>
    %50 = arith.extui %49 : vector<128x1xi1> to vector<128x1xi32>
    %51 = arith.sitofp %50 : vector<128x1xi32> to vector<128x1xf32>
    %52 = vector.broadcast %51 : vector<128x1xf32> to vector<128x128xf32>
    %53 = arith.mulf %13, %52 : vector<128x128xf32>
    %cst_26 = arith.constant dense<0xFF800000> : vector<128xf32>
    %54 = vector.multi_reduction <maximumf>, %53, %cst_26 [0] : vector<128x128xf32> to vector<128xf32>
    %55 = vector.shape_cast %54 : vector<128xf32> to vector<1x128xf32>
    %c3 = arith.constant 3 : index
    %c0_27 = arith.constant 0 : index
    %56 = vector.load %arg9[%c3, %c0_27] : memref<8x128xf32, #tpu.memory_space<vmem>>, vector<1x128xf32>
    %57 = arith.maximumf %56, %55 : vector<1x128xf32>
    %c3_28 = arith.constant 3 : index
    %c0_29 = arith.constant 0 : index
    %58 = vector.load %arg9[%c3_28, %c0_29] : memref<8x128xf32, #tpu.memory_space<vmem>>, vector<1x128xf32>
    tpu.vector_store %arg9[%c3_28, %c0_29], %57 {strides = array<i32>} : memref<8x128xf32, #tpu.memory_space<vmem>>, vector<1x128xf32>,
    %c4_i32 = arith.constant 4 : i32
    %59 = vector.broadcast %c4_i32 : i32 to vector<128x1xi32>
    %60 = arith.cmpi eq, %14, %59 : vector<128x1xi32>
    %61 = arith.extui %60 : vector<128x1xi1> to vector<128x1xi32>
    %62 = arith.sitofp %61 : vector<128x1xi32> to vector<128x1xf32>
    %63 = vector.broadcast %62 : vector<128x1xf32> to vector<128x128xf32>
    %64 = arith.mulf %13, %63 : vector<128x128xf32>
    %cst_30 = arith.constant dense<0xFF800000> : vector<128xf32>
    %65 = vector.multi_reduction <maximumf>, %64, %cst_30 [0] : vector<128x128xf32> to vector<128xf32>
    %66 = vector.shape_cast %65 : vector<128xf32> to vector<1x128xf32>
    %c4 = arith.constant 4 : index
    %c0_31 = arith.constant 0 : index
    %67 = vector.load %arg9[%c4, %c0_31] : memref<8x128xf32, #tpu.memory_space<vmem>>, vector<1x128xf32>
    %68 = arith.maximumf %67, %66 : vector<1x128xf32>
    %c4_32 = arith.constant 4 : index
    %c0_33 = arith.constant 0 : index
    %69 = vector.load %arg9[%c4_32, %c0_33] : memref<8x128xf32, #tpu.memory_space<vmem>>, vector<1x128xf32>
    tpu.vector_store %arg9[%c4_32, %c0_33], %68 {strides = array<i32>} : memref<8x128xf32, #tpu.memory_space<vmem>>, vector<1x128xf32>,
    %c5_i32 = arith.constant 5 : i32
    %70 = vector.broadcast %c5_i32 : i32 to vector<128x1xi32>
    %71 = arith.cmpi eq, %14, %70 : vector<128x1xi32>
    %72 = arith.extui %71 : vector<128x1xi1> to vector<128x1xi32>
    %73 = arith.sitofp %72 : vector<128x1xi32> to vector<128x1xf32>
    %74 = vector.broadcast %73 : vector<128x1xf32> to vector<128x128xf32>
    %75 = arith.mulf %13, %74 : vector<128x128xf32>
    %cst_34 = arith.constant dense<0xFF800000> : vector<128xf32>
    %76 = vector.multi_reduction <maximumf>, %75, %cst_34 [0] : vector<128x128xf32> to vector<128xf32>
    %77 = vector.shape_cast %76 : vector<128xf32> to vector<1x128xf32>
    %c5 = arith.constant 5 : index
    %c0_35 = arith.constant 0 : index
    %78 = vector.load %arg9[%c5, %c0_35] : memref<8x128xf32, #tpu.memory_space<vmem>>, vector<1x128xf32>
    %79 = arith.maximumf %78, %77 : vector<1x128xf32>
    %c5_36 = arith.constant 5 : index
    %c0_37 = arith.constant 0 : index
    %80 = vector.load %arg9[%c5_36, %c0_37] : memref<8x128xf32, #tpu.memory_space<vmem>>, vector<1x128xf32>
    tpu.vector_store %arg9[%c5_36, %c0_37], %79 {strides = array<i32>} : memref<8x128xf32, #tpu.memory_space<vmem>>, vector<1x128xf32>,
    %c6_i32 = arith.constant 6 : i32
    %81 = vector.broadcast %c6_i32 : i32 to vector<128x1xi32>
    %82 = arith.cmpi eq, %14, %81 : vector<128x1xi32>
    %83 = arith.extui %82 : vector<128x1xi1> to vector<128x1xi32>
    %84 = arith.sitofp %83 : vector<128x1xi32> to vector<128x1xf32>
    %85 = vector.broadcast %84 : vector<128x1xf32> to vector<128x128xf32>
    %86 = arith.mulf %13, %85 : vector<128x128xf32>
    %cst_38 = arith.constant dense<0xFF800000> : vector<128xf32>
    %87 = vector.multi_reduction <maximumf>, %86, %cst_38 [0] : vector<128x128xf32> to vector<128xf32>
    %88 = vector.shape_cast %87 : vector<128xf32> to vector<1x128xf32>
    %c6 = arith.constant 6 : index
    %c0_39 = arith.constant 0 : index
    %89 = vector.load %arg9[%c6, %c0_39] : memref<8x128xf32, #tpu.memory_space<vmem>>, vector<1x128xf32>
    %90 = arith.maximumf %89, %88 : vector<1x128xf32>
    %c6_40 = arith.constant 6 : index
    %c0_41 = arith.constant 0 : index
    %91 = vector.load %arg9[%c6_40, %c0_41] : memref<8x128xf32, #tpu.memory_space<vmem>>, vector<1x128xf32>
    tpu.vector_store %arg9[%c6_40, %c0_41], %90 {strides = array<i32>} : memref<8x128xf32, #tpu.memory_space<vmem>>, vector<1x128xf32>,
    %c7_i32 = arith.constant 7 : i32
    %92 = vector.broadcast %c7_i32 : i32 to vector<128x1xi32>
    %93 = arith.cmpi eq, %14, %92 : vector<128x1xi32>
    %94 = arith.extui %93 : vector<128x1xi1> to vector<128x1xi32>
    %95 = arith.sitofp %94 : vector<128x1xi32> to vector<128x1xf32>
    %96 = vector.broadcast %95 : vector<128x1xf32> to vector<128x128xf32>
    %97 = arith.mulf %13, %96 : vector<128x128xf32>
    %cst_42 = arith.constant dense<0xFF800000> : vector<128xf32>
    %98 = vector.multi_reduction <maximumf>, %97, %cst_42 [0] : vector<128x128xf32> to vector<128xf32>
    %99 = vector.shape_cast %98 : vector<128xf32> to vector<1x128xf32>
    %c7 = arith.constant 7 : index
    %c0_43 = arith.constant 0 : index
    %100 = vector.load %arg9[%c7, %c0_43] : memref<8x128xf32, #tpu.memory_space<vmem>>, vector<1x128xf32>
    %101 = arith.maximumf %100, %99 : vector<1x128xf32>
    %c7_44 = arith.constant 7 : index
    %c0_45 = arith.constant 0 : index
    %102 = vector.load %arg9[%c7_44, %c0_45] : memref<8x128xf32, #tpu.memory_space<vmem>>, vector<1x128xf32>
    tpu.vector_store %arg9[%c7_44, %c0_45], %101 {strides = array<i32>} : memref<8x128xf32, #tpu.memory_space<vmem>>, vector<1x128xf32>,
    %c0_i32_46 = arith.constant 0 : i32
    %103 = arith.cmpi eq, %arg0, %c0_i32_46 : i32
    %104 = arith.extui %103 : i1 to i32
    %c0_i32_47 = arith.constant 0 : i32
    %105 = arith.cmpi ne, %104, %c0_i32_47 : i32
    scf.if %105 {
      %c0_48 = arith.constant 0 : index
      %c0_49 = arith.constant 0 : index
      %106 = vector.load %arg9[%c0_48, %c0_49] : memref<8x128xf32, #tpu.memory_space<vmem>>, vector<8x128xf32>
      %c0_50 = arith.constant 0 : index
      %c0_51 = arith.constant 0 : index
      %107 = vector.load %arg6[%c0_50, %c0_51] : memref<128x128xf32, #tpu.memory_space<vmem>>, vector<128x128xf32>
      %cst_52 = arith.constant dense<0.000000e+00> : vector<8x128xf32>
      %108 = tpu.matmul %106, %107, %cst_52 {dimension_numbers = #tpu.dot_dimension_numbers<[1], [0], [0], [1], [0, 0, 1, 1], [], []>} : vector<8x128xf32>, vector<128x128xf32>, vector<8x128xf32> -> vector<8x128xf32>
      %c0_53 = arith.constant 0 : index
      %c0_54 = arith.constant 0 : index
      %109 = vector.load %arg7[%c0_53, %c0_54] : memref<1x128xf32, #tpu.memory_space<vmem>>, vector<1x128xf32>
      %110 = vector.broadcast %109 : vector<1x128xf32> to vector<8x128xf32>
      %111 = arith.addf %108, %110 : vector<8x128xf32>
      %c0_55 = arith.constant 0 : index
      %c0_56 = arith.constant 0 : index
      %112 = vector.load %arg8[%c0_55, %c0_56] : memref<8x128xf32, #tpu.memory_space<vmem>>, vector<8x128xf32>
      tpu.vector_store %arg8[%c0_55, %c0_56], %111 {strides = array<i32>} : memref<8x128xf32, #tpu.memory_space<vmem>>, vector<8x128xf32>,
    } else {
    }
    return
  }
  func.func @transform_0(%arg0: i32) -> (i32, i32) {
    %c0_i32 = arith.constant 0 : i32
    %c0_i32_0 = arith.constant 0 : i32
    return %arg0, %c0_i32 : i32, i32
  }
  func.func @transform_1(%arg0: i32) -> (i32, i32) {
    %c0_i32 = arith.constant 0 : i32
    %c0_i32_0 = arith.constant 0 : i32
    %c0_i32_1 = arith.constant 0 : i32
    return %c0_i32, %c0_i32_0 : i32, i32
  }
  func.func @transform_2(%arg0: i32) -> (i32, i32) {
    %c0_i32 = arith.constant 0 : i32
    %c0_i32_0 = arith.constant 0 : i32
    %c0_i32_1 = arith.constant 0 : i32
    return %c0_i32, %c0_i32_0 : i32, i32
  }
  func.func @transform_3(%arg0: i32) -> (i32, i32) {
    %c0_i32 = arith.constant 0 : i32
    %c0_i32_0 = arith.constant 0 : i32
    %c0_i32_1 = arith.constant 0 : i32
    return %c0_i32, %c0_i32_0 : i32, i32
  }
  func.func @transform_4(%arg0: i32) -> (i32, i32) {
    %c0_i32 = arith.constant 0 : i32
    %c0_i32_0 = arith.constant 0 : i32
    return %arg0, %c0_i32 : i32, i32
  }
  func.func @transform_5(%arg0: i32) -> (i32, i32) {
    %c0_i32 = arith.constant 0 : i32
    %c0_i32_0 = arith.constant 0 : i32
    %c0_i32_1 = arith.constant 0 : i32
    return %c0_i32, %c0_i32_0 : i32, i32
  }
  func.func @transform_6(%arg0: i32) -> (i32, i32) {
    %c0_i32 = arith.constant 0 : i32
    %c0_i32_0 = arith.constant 0 : i32
    %c0_i32_1 = arith.constant 0 : i32
    return %c0_i32, %c0_i32_0 : i32, i32
  }
  func.func @transform_7(%arg0: i32) -> (i32, i32) {
    %c0_i32 = arith.constant 0 : i32
    %c0_i32_0 = arith.constant 0 : i32
    %c0_i32_1 = arith.constant 0 : i32
    return %c0_i32, %c0_i32_0 : i32, i32
  }
}

</mosaic_0001>

<llo_original>
// kernel: tpu_custom_call.1
$region0: #{tpu_custom_call.1}
  #allocation0 [shape = 'u32[]', space=smem, size = 0x4, offset = 0x4, fixed_abs, tag = 'smem constant byte address 0x4 - core index']
  #allocation1 [shape = 'u32[144,128]{1,0:T(1,128)}', space=vmem, size = 0x12000, scoped, tag = 'internal scratch']
  #allocation2 [shape = 'f32[8,128]{1,0:T(8,128)}', space=vmem, size = 0x1000, scoped, tag = 'scratch operand']
  %s0 = inlined_call_operand.vmem [shape: bf16[128,128], index: 0, kind: input, shape index: {}]
  %s1 = inlined_call_operand.vmem [shape: bf16[128,8], index: 1, kind: input, shape index: {}]
  %s2 = inlined_call_operand.vmem [shape: bf16[8,128], index: 2, kind: input, shape index: {}]
  %s3 = inlined_call_operand.vmem [shape: f32[1,128], index: 3, kind: input, shape index: {}]
  %s4 = inlined_call_operand.vmem [shape: s32[128,1], index: 4, kind: input, shape index: {}]
  %s5 = inlined_call_operand.vmem [shape: f32[128,128], index: 5, kind: input, shape index: {}]
  %s6 = inlined_call_operand.vmem [shape: f32[1,128], index: 6, kind: input, shape index: {}]
  %s7 = inlined_call_operand.hbm [shape: f32[8,128], index: 7, kind: output, shape index: {}]
  %s8 = sld [smem:[#allocation0]]
  $region46: #{tpu_custom_call.1} parent=0
    _
  %s10 = ssub.s32 1, %s8
  %s11 = scalar_select 0, %s10, %s8
  $region1: #{tpu_custom_call.1} parent=0
    #allocation3 [shape = 'u8[4096]{0}', space=vmem, size = 0x1000, scoped, tag = 'output window, operand 0, single buffered']
    #allocation4 [shape = 's32[1]{0}', space=sflag, size = 0x4, scoped, tag = 'scoped memory for tpu_custom_call.1']
    %12 = vsyncpa [#allocation4], 0
    // Predicated region
    $region2: #{tpu_custom_call.1} parent=1 // pred_check
      _
    $region3: #{tpu_custom_call.1} parent=1 // pred_check_branch
      %14 = sbr.rel (0) target = $region5
    $region4: #{tpu_custom_call.1} parent=1 // pred_region
      _
    $region5: #{tpu_custom_call.1} parent=1 // pred_fallthru
      _
    // Predicated region
    $region6: #{tpu_custom_call.1} parent=1 // pred_check
      _
    $region7: #{tpu_custom_call.1} parent=1 // pred_check_branch
      %16 = sbr.rel (0) target = $region9
    $region8: #{tpu_custom_call.1} parent=1 // pred_region
      _
    $region9: #{tpu_custom_call.1} parent=1 // pred_fallthru
      _
    // Predicated region
    $region10: #{tpu_custom_call.1} parent=1 // pred_check
      _
    $region11: #{tpu_custom_call.1} parent=1 // pred_check_branch
      %18 = sbr.rel (0) target = $region13
    $region12: #{tpu_custom_call.1} parent=1 // pred_region
      _
    $region13: #{tpu_custom_call.1} parent=1 // pred_fallthru
      _
    // Predicated region
    $region14: #{tpu_custom_call.1} parent=1 // pred_check
      _
    $region15: #{tpu_custom_call.1} parent=1 // pred_check_branch
      %20 = sbr.rel (0) target = $region17
    $region16: #{tpu_custom_call.1} parent=1 // pred_region
      _
    $region17: #{tpu_custom_call.1} parent=1 // pred_fallthru
      _
    // Predicated region
    $region18: #{tpu_custom_call.1} parent=1 // pred_check
      _
    $region19: #{tpu_custom_call.1} parent=1 // pred_check_branch
      %22 = sbr.rel (0) target = $region21
    $region20: #{tpu_custom_call.1} parent=1 // pred_region
      _
    $region21: #{tpu_custom_call.1} parent=1 // pred_fallthru
      _
    // Predicated region
    $region22: #{tpu_custom_call.1} parent=1 // pred_check
      _
    $region23: #{tpu_custom_call.1} parent=1 // pred_check_branch
      %24 = sbr.rel (0) target = $region25
    $region24: #{tpu_custom_call.1} parent=1 // pred_region
      _
    $region25: #{tpu_custom_call.1} parent=1 // pred_fallthru
      _
    // Predicated region
    $region26: #{tpu_custom_call.1} parent=1 // pred_check
      _
    $region27: #{tpu_custom_call.1} parent=1 // pred_check_branch
      %26 = sbr.rel (0) target = $region29
    $region28: #{tpu_custom_call.1} parent=1 // pred_region
      _
    $region29: #{tpu_custom_call.1} parent=1 // pred_fallthru
      _
    %p28 = scmp.eq.s32.totalorder 0, 0
    // Predicated region
    $region30: #{tpu_custom_call.1} parent=1 // pred_check
      %p29 = pneg %p28
    $region31: #{tpu_custom_call.1} parent=1 // pred_check_branch
      %31 = sbr.rel (%p29) target = $region33
    $region32: #{tpu_custom_call.1} parent=1 // pred_region
      %32 = vst [vmem:[#allocation2] sm:$0xff] 0.0
    $region33: #{tpu_custom_call.1} parent=1 // pred_fallthru
      _
    %v33 = vld [vmem:[%s0] sm:$0xf]
    %v34 = vld [vmem:[%s0 + $0x4] sm:$0xf]
    %v35 = vld [vmem:[%s0 + $0x8] sm:$0xf]
    %v36 = vld [vmem:[%s0 + $0xc] sm:$0xf]
    %v37 = vld [vmem:[%s0 + $0x10] sm:$0xf]
    %v38 = vld [vmem:[%s0 + $0x14] sm:$0xf]
    %v39 = vld [vmem:[%s0 + $0x18] sm:$0xf]
    %v40 = vld [vmem:[%s0 + $0x1c] sm:$0xf]
    %v41 = vld [vmem:[%s0 + $0x20] sm:$0xf]
    %v42 = vld [vmem:[%s0 + $0x24] sm:$0xf]
    %v43 = vld [vmem:[%s0 + $0x28] sm:$0xf]
    %v44 = vld [vmem:[%s0 + $0x2c] sm:$0xf]
    %v45 = vld [vmem:[%s0 + $0x30] sm:$0xf]
    %v46 = vld [vmem:[%s0 + $0x34] sm:$0xf]
    %v47 = vld [vmem:[%s0 + $0x38] sm:$0xf]
    %v48 = vld [vmem:[%s0 + $0x3c] sm:$0xf]
    %v49 = vld [vmem:[%s1] sm:$0xf]
    %v50 = vld [vmem:[%s1 + $0x4] sm:$0xf]
    %v51 = vld [vmem:[%s1 + $0x8] sm:$0xf]
    %v52 = vld [vmem:[%s1 + $0xc] sm:$0xf]
    %v53 = vld [vmem:[%s1 + $0x10] sm:$0xf]
    %v54 = vld [vmem:[%s1 + $0x14] sm:$0xf]
    %v55 = vld [vmem:[%s1 + $0x18] sm:$0xf]
    %v56 = vld [vmem:[%s1 + $0x1c] sm:$0xf]
    %v57 = vld [vmem:[%s1 + $0x20] sm:$0xf]
    %v58 = vld [vmem:[%s1 + $0x24] sm:$0xf]
    %v59 = vld [vmem:[%s1 + $0x28] sm:$0xf]
    %v60 = vld [vmem:[%s1 + $0x2c] sm:$0xf]
    %v61 = vld [vmem:[%s1 + $0x30] sm:$0xf]
    %v62 = vld [vmem:[%s1 + $0x34] sm:$0xf]
    %v63 = vld [vmem:[%s1 + $0x38] sm:$0xf]
    %v64 = vld [vmem:[%s1 + $0x3c] sm:$0xf]
    %v81 = vunpack.c.l.b16 %v33
    %v82 = vunpack.c.l.b16 %v34
    %v83 = vunpack.c.l.b16 %v35
    %v84 = vunpack.c.l.b16 %v36
    %v85 = vunpack.c.l.b16 %v37
    %v86 = vunpack.c.l.b16 %v38
    %v87 = vunpack.c.l.b16 %v39
    %v88 = vunpack.c.l.b16 %v40
    %v89 = vunpack.c.l.b16 %v41
    %v90 = vunpack.c.l.b16 %v42
    %v91 = vunpack.c.l.b16 %v43
    %v92 = vunpack.c.l.b16 %v44
    %v93 = vunpack.c.l.b16 %v45
    %v94 = vunpack.c.l.b16 %v46
    %v95 = vunpack.c.l.b16 %v47
    %v96 = vunpack.c.l.b16 %v48
    %v97 = vpack.c.b16 %v82, %v81
    %v98 = vpack.c.b16 %v84, %v83
    %v99 = vpack.c.b16 %v86, %v85
    %v100 = vpack.c.b16 %v88, %v87
    %v101 = vpack.c.b16 %v90, %v89
    %v102 = vpack.c.b16 %v92, %v91
    %v103 = vpack.c.b16 %v94, %v93
    %v104 = vpack.c.b16 %v96, %v95
    %v129 = vunpack.c.l.b16 %v49
    %v130 = vunpack.c.l.b16 %v50
    %v131 = vunpack.c.l.b16 %v51
    %v132 = vunpack.c.l.b16 %v52
    %v133 = vunpack.c.l.b16 %v53
    %v134 = vunpack.c.l.b16 %v54
    %v135 = vunpack.c.l.b16 %v55
    %v136 = vunpack.c.l.b16 %v56
    %v137 = vunpack.c.l.b16 %v57
    %v138 = vunpack.c.l.b16 %v58
    %v139 = vunpack.c.l.b16 %v59
    %v140 = vunpack.c.l.b16 %v60
    %v141 = vunpack.c.l.b16 %v61
    %v142 = vunpack.c.l.b16 %v62
    %v143 = vunpack.c.l.b16 %v63
    %v144 = vunpack.c.l.b16 %v64
    %v145 = vpack.c.b16 %v130, %v129
    %v146 = vpack.c.b16 %v132, %v131
    %v147 = vpack.c.b16 %v134, %v133
    %v148 = vpack.c.b16 %v136, %v135
    %v149 = vpack.c.b16 %v138, %v137
    %v150 = vpack.c.b16 %v140, %v139
    %v151 = vpack.c.b16 %v142, %v141
    %v152 = vpack.c.b16 %v144, %v143
    %161 = vmatprep.subr.bf16.mxu0 0
    %162 = vmatpush1.bf16.msra.mxu0 %v152
    %163 = vmatprep.subr.bf16.mxu0 0
    %164 = vmatpush1.bf16.msra.mxu0 %v151
    %165 = vmatprep.subr.bf16.mxu0 0
    %166 = vmatpush1.bf16.msra.mxu0 %v150
    %167 = vmatprep.subr.bf16.mxu0 0
    %168 = vmatpush1.bf16.msra.mxu0 %v149
    %169 = vmatprep.subr.bf16.mxu0 0
    %170 = vmatpush1.bf16.msra.mxu0 %v148
    %171 = vmatprep.subr.bf16.mxu0 0
    %172 = vmatpush1.bf16.msra.mxu0 %v147
    %173 = vmatprep.subr.bf16.mxu0 0
    %174 = vmatpush1.bf16.msra.mxu0 %v146
    %175 = vmatprep.subr.bf16.mxu0 0
    %176 = vmatpush1.bf16.msra.mxu0 %v145
    %177 = vmatprep.subr.bf16.mxu0 0
    %178 = vmatpush2.bf16.msra.mxu0 0
    %179 = vmatprep.subr.bf16.mxu0 0
    %180 = vmatpush2.bf16.msra.mxu0 0
    %181 = vmatprep.subr.bf16.mxu0 0
    %182 = vmatpush2.bf16.msra.mxu0 0
    %183 = vmatprep.subr.bf16.mxu0 0
    %184 = vmatpush2.bf16.msra.mxu0 0
    %185 = vmatprep.subr.bf16.mxu0 0
    %186 = vmatpush2.bf16.msra.mxu0 0
    %187 = vmatprep.subr.bf16.mxu0 0
    %188 = vmatpush2.bf16.msra.mxu0 0
    %189 = vmatprep.subr.bf16.mxu0 0
    %190 = vmatpush2.bf16.msra.mxu0 0
    %191 = vmatprep.subr.bf16.mxu0 0
    %192 = vmatpush2.bf16.msra.mxu0 0
    %193 = vmatprep.mubr.bf16.mxu0 0
    %194 = vmatmul.mubr.bf16.gmra.mxu0 %v97
    %v195 = vpop.f32.mrf.mxu0
    %v196 = vadd.f32 0.0, %v195
    %v197 = vpop.f32.mrf.mxu0
    %v198 = vpop.f32.mrf.mxu0
    %v199 = vadd.f32 0.0, %v198
    %v200 = vpop.f32.mrf.mxu0
    %201 = vmatprep.mubr.bf16.mxu0 0
    %202 = vmatmul.mubr.bf16.gmra.mxu0 %v98
    %v203 = vpop.f32.mrf.mxu0
    %v204 = vadd.f32 0.0, %v203
    %v205 = vpop.f32.mrf.mxu0
    %v206 = vpop.f32.mrf.mxu0
    %v207 = vadd.f32 0.0, %v206
    %v208 = vpop.f32.mrf.mxu0
    %209 = vmatprep.mubr.bf16.mxu0 0
    %210 = vmatmul.mubr.bf16.gmra.mxu0 %v99
    %v211 = vpop.f32.mrf.mxu0
    %v212 = vadd.f32 0.0, %v211
    %v213 = vpop.f32.mrf.mxu0
    %v214 = vpop.f32.mrf.mxu0
    %v215 = vadd.f32 0.0, %v214
    %v216 = vpop.f32.mrf.mxu0
    %217 = vmatprep.mubr.bf16.mxu0 0
    %218 = vmatmul.mubr.bf16.gmra.mxu0 %v100
    %v219 = vpop.f32.mrf.mxu0
    %v220 = vadd.f32 0.0, %v219
    %v221 = vpop.f32.mrf.mxu0
    %v222 = vpop.f32.mrf.mxu0
    %v223 = vadd.f32 0.0, %v222
    %v224 = vpop.f32.mrf.mxu0
    %225 = vmatprep.mubr.bf16.mxu0 0
    %226 = vmatmul.mubr.bf16.gmra.mxu0 %v101
    %v227 = vpop.f32.mrf.mxu0
    %v228 = vadd.f32 0.0, %v227
    %v229 = vpop.f32.mrf.mxu0
    %v230 = vpop.f32.mrf.mxu0
    %v231 = vadd.f32 0.0, %v230
    %v232 = vpop.f32.mrf.mxu0
    %233 = vmatprep.mubr.bf16.mxu0 0
    %234 = vmatmul.mubr.bf16.gmra.mxu0 %v102
    %v235 = vpop.f32.mrf.mxu0
    %v236 = vadd.f32 0.0, %v235
    %v237 = vpop.f32.mrf.mxu0
    %v238 = vpop.f32.mrf.mxu0
    %v239 = vadd.f32 0.0, %v238
    %v240 = vpop.f32.mrf.mxu0
    %241 = vmatprep.mubr.bf16.mxu0 0
    %242 = vmatmul.mubr.bf16.gmra.mxu0 %v103
    %v243 = vpop.f32.mrf.mxu0
    %v244 = vadd.f32 0.0, %v243
    %v245 = vpop.f32.mrf.mxu0
    %v246 = vpop.f32.mrf.mxu0
    %v247 = vadd.f32 0.0, %v246
    %v248 = vpop.f32.mrf.mxu0
    %249 = vmatprep.mubr.bf16.mxu0 0
    %250 = vmatmul.mubr.bf16.gmra.mxu0 %v104
    %v251 = vpop.f32.mrf.mxu0
    %v252 = vadd.f32 0.0, %v251
    %v253 = vpop.f32.mrf.mxu0
    %v254 = vpop.f32.mrf.mxu0
    %v255 = vadd.f32 0.0, %v254
    %v256 = vpop.f32.mrf.mxu0
    %257 = vdwg.mxu0
    %v258 = vpack.c.bf16 %v199, %v196
    %v259 = vpack.c.bf16 %v207, %v204
    %v260 = vpack.c.bf16 %v215, %v212
    %v261 = vpack.c.bf16 %v223, %v220
    %v262 = vpack.c.bf16 %v231, %v228
    %v263 = vpack.c.bf16 %v239, %v236
    %v264 = vpack.c.bf16 %v247, %v244
    %v265 = vpack.c.bf16 %v255, %v252
    %v266 = vld [vmem:[%s2] sm:$0xf]
    %v267 = vld [vmem:[%s3] sm:$0x1]
    %v269 = vlaneseq
    %v270 = vshrl.u32 %v269, 7
    %v271 = vsub.s32 0, %v270
    %v272 = vrot.slane %v267, %v271
    %vm274 = vcmask 64512
    %v276 = vsel %vm274, %v258, 0
    %v279 = vsel %vm274, %v259, 0
    %v282 = vsel %vm274, %v260, 0
    %v285 = vsel %vm274, %v261, 0
    %v288 = vsel %vm274, %v262, 0
    %v291 = vsel %vm274, %v263, 0
    %v294 = vsel %vm274, %v264, 0
    %v297 = vsel %vm274, %v265, 0
    %vm299 = vcmask 1043456
    %v301 = vsel %vm299, %v266, 0
    %303 = vmatprep.subr.bf16.mxu0 0
    %304 = vmatpush1.bf16.msra.mxu0 0
    %305 = vmatprep.subr.bf16.mxu0 0
    %306 = vmatpush1.bf16.msra.mxu0 0
    %307 = vmatprep.subr.bf16.mxu0 0
    %308 = vmatpush1.bf16.msra.mxu0 0
    %309 = vmatprep.subr.bf16.mxu0 0
    %310 = vmatpush1.bf16.msra.mxu0 0
    %311 = vmatprep.subr.bf16.mxu0 0
    %312 = vmatpush1.bf16.msra.mxu0 0
    %313 = vmatprep.subr.bf16.mxu0 0
    %314 = vmatpush1.bf16.msra.mxu0 0
    %315 = vmatprep.subr.bf16.mxu0 0
    %316 = vmatpush1.bf16.msra.mxu0 0
    %317 = vmatprep.subr.bf16.mxu0 0
    %318 = vmatpush1.bf16.msra.mxu0 %v301
    %319 = vmatprep.subr.bf16.mxu0 0
    %320 = vmatpush2.bf16.msra.mxu0 0
    %321 = vmatprep.subr.bf16.mxu0 0
    %322 = vmatpush2.bf16.msra.mxu0 0
    %323 = vmatprep.subr.bf16.mxu0 0
    %324 = vmatpush2.bf16.msra.mxu0 0
    %325 = vmatprep.subr.bf16.mxu0 0
    %326 = vmatpush2.bf16.msra.mxu0 0
    %327 = vmatprep.subr.bf16.mxu0 0
    %328 = vmatpush2.bf16.msra.mxu0 0
    %329 = vmatprep.subr.bf16.mxu0 0
    %330 = vmatpush2.bf16.msra.mxu0 0
    %331 = vmatprep.subr.bf16.mxu0 0
    %332 = vmatpush2.bf16.msra.mxu0 0
    %333 = vmatprep.subr.bf16.mxu0 0
    %334 = vmatpush2.bf16.msra.mxu0 0
    %335 = vmatprep.mubr.bf16.mxu0 0
    %336 = vmatmul.mubr.bf16.gmra.mxu0 %v276
    %v337 = vpop.f32.mrf.mxu0
    %v338 = vadd.f32 %v272, %v337
    %v339 = vpop.f32.mrf.mxu0
    %v340 = vpop.f32.mrf.mxu0
    %v341 = vadd.f32 %v272, %v340
    %v342 = vpop.f32.mrf.mxu0
    %343 = vmatprep.mubr.bf16.mxu0 0
    %344 = vmatmul.mubr.bf16.gmra.mxu0 %v279
    %v345 = vpop.f32.mrf.mxu0
    %v346 = vadd.f32 %v272, %v345
    %v347 = vpop.f32.mrf.mxu0
    %v348 = vpop.f32.mrf.mxu0
    %v349 = vadd.f32 %v272, %v348
    %v350 = vpop.f32.mrf.mxu0
    %351 = vmatprep.mubr.bf16.mxu0 0
    %352 = vmatmul.mubr.bf16.gmra.mxu0 %v282
    %v353 = vpop.f32.mrf.mxu0
    %v354 = vadd.f32 %v272, %v353
    %v355 = vpop.f32.mrf.mxu0
    %v356 = vpop.f32.mrf.mxu0
    %v357 = vadd.f32 %v272, %v356
    %v358 = vpop.f32.mrf.mxu0
    %359 = vmatprep.mubr.bf16.mxu0 0
    %360 = vmatmul.mubr.bf16.gmra.mxu0 %v285
    %v361 = vpop.f32.mrf.mxu0
    %v362 = vadd.f32 %v272, %v361
    %v363 = vpop.f32.mrf.mxu0
    %v364 = vpop.f32.mrf.mxu0
    %v365 = vadd.f32 %v272, %v364
    %v366 = vpop.f32.mrf.mxu0
    %367 = vmatprep.mubr.bf16.mxu0 0
    %368 = vmatmul.mubr.bf16.gmra.mxu0 %v288
    %v369 = vpop.f32.mrf.mxu0
    %v370 = vadd.f32 %v272, %v369
    %v371 = vpop.f32.mrf.mxu0
    %v372 = vpop.f32.mrf.mxu0
    %v373 = vadd.f32 %v272, %v372
    %v374 = vpop.f32.mrf.mxu0
    %375 = vmatprep.mubr.bf16.mxu0 0
    %376 = vmatmul.mubr.bf16.gmra.mxu0 %v291
    %v377 = vpop.f32.mrf.mxu0
    %v378 = vadd.f32 %v272, %v377
    %v379 = vpop.f32.mrf.mxu0
    %v380 = vpop.f32.mrf.mxu0
    %v381 = vadd.f32 %v272, %v380
    %v382 = vpop.f32.mrf.mxu0
    %383 = vmatprep.mubr.bf16.mxu0 0
    %384 = vmatmul.mubr.bf16.gmra.mxu0 %v294
    %v385 = vpop.f32.mrf.mxu0
    %v386 = vadd.f32 %v272, %v385
    %v387 = vpop.f32.mrf.mxu0
    %v388 = vpop.f32.mrf.mxu0
    %v389 = vadd.f32 %v272, %v388
    %v390 = vpop.f32.mrf.mxu0
    %391 = vmatprep.mubr.bf16.mxu0 0
    %392 = vmatmul.mubr.bf16.gmra.mxu0 %v297
    %v393 = vpop.f32.mrf.mxu0
    %v394 = vadd.f32 %v272, %v393
    %v395 = vpop.f32.mrf.mxu0
    %v396 = vpop.f32.mrf.mxu0
    %v397 = vadd.f32 %v272, %v396
    %v398 = vpop.f32.mrf.mxu0
    %399 = vdwg.mxu0
    %v400 = vmax.f32 %v338, 0.0
    %v401 = vmax.f32 %v341, 0.0
    %v402 = vmax.f32 %v346, 0.0
    %v403 = vmax.f32 %v349, 0.0
    %v404 = vmax.f32 %v354, 0.0
    %v405 = vmax.f32 %v357, 0.0
    %v406 = vmax.f32 %v362, 0.0
    %v407 = vmax.f32 %v365, 0.0
    %v408 = vmax.f32 %v370, 0.0
    %v409 = vmax.f32 %v373, 0.0
    %v410 = vmax.f32 %v378, 0.0
    %v411 = vmax.f32 %v381, 0.0
    %v412 = vmax.f32 %v386, 0.0
    %v413 = vmax.f32 %v389, 0.0
    %v414 = vmax.f32 %v394, 0.0
    %v415 = vmax.f32 %v397, 0.0
    %v416 = vld [vmem:[%s4] sm:$0xff]
    %v417 = vld [vmem:[%s4 + $0x8] sm:$0xff]
    %v418 = vld [vmem:[%s4 + $0x10] sm:$0xff]
    %v419 = vld [vmem:[%s4 + $0x18] sm:$0xff]
    %v420 = vld [vmem:[%s4 + $0x20] sm:$0xff]
    %v421 = vld [vmem:[%s4 + $0x28] sm:$0xff]
    %v422 = vld [vmem:[%s4 + $0x30] sm:$0xff]
    %v423 = vld [vmem:[%s4 + $0x38] sm:$0xff]
    %v424 = vld [vmem:[%s4 + $0x40] sm:$0xff]
    %v425 = vld [vmem:[%s4 + $0x48] sm:$0xff]
    %v426 = vld [vmem:[%s4 + $0x50] sm:$0xff]
    %v427 = vld [vmem:[%s4 + $0x58] sm:$0xff]
    %v428 = vld [vmem:[%s4 + $0x60] sm:$0xff]
    %v429 = vld [vmem:[%s4 + $0x68] sm:$0xff]
    %v430 = vld [vmem:[%s4 + $0x70] sm:$0xff]
    %v431 = vld [vmem:[%s4 + $0x78] sm:$0xff]
    %vm432 = vcmp.eq.s32.totalorder %v416, 0
    %vm433 = vcmp.eq.s32.totalorder %v417, 0
    %vm434 = vcmp.eq.s32.totalorder %v418, 0
    %vm435 = vcmp.eq.s32.totalorder %v419, 0
    %vm436 = vcmp.eq.s32.totalorder %v420, 0
    %vm437 = vcmp.eq.s32.totalorder %v421, 0
    %vm438 = vcmp.eq.s32.totalorder %v422, 0
    %vm439 = vcmp.eq.s32.totalorder %v423, 0
    %vm440 = vcmp.eq.s32.totalorder %v424, 0
    %vm441 = vcmp.eq.s32.totalorder %v425, 0
    %vm442 = vcmp.eq.s32.totalorder %v426, 0
    %vm443 = vcmp.eq.s32.totalorder %v427, 0
    %vm444 = vcmp.eq.s32.totalorder %v428, 0
    %vm445 = vcmp.eq.s32.totalorder %v429, 0
    %vm446 = vcmp.eq.s32.totalorder %v430, 0
    %vm447 = vcmp.eq.s32.totalorder %v431, 0
    %v448 = vsel %vm432, 1, 0
    %v449 = vsel %vm433, 1, 0
    %v450 = vsel %vm434, 1, 0
    %v451 = vsel %vm435, 1, 0
    %v452 = vsel %vm436, 1, 0
    %v453 = vsel %vm437, 1, 0
    %v454 = vsel %vm438, 1, 0
    %v455 = vsel %vm439, 1, 0
    %v456 = vsel %vm440, 1, 0
    %v457 = vsel %vm441, 1, 0
    %v458 = vsel %vm442, 1, 0
    %v459 = vsel %vm443, 1, 0
    %v460 = vsel %vm444, 1, 0
    %v461 = vsel %vm445, 1, 0
    %v462 = vsel %vm446, 1, 0
    %v463 = vsel %vm447, 1, 0
    %v464 = vcvt.s32.f32 %v448
    %v465 = vcvt.s32.f32 %v449
    %v466 = vcvt.s32.f32 %v450
    %v467 = vcvt.s32.f32 %v451
    %v468 = vcvt.s32.f32 %v452
    %v469 = vcvt.s32.f32 %v453
    %v470 = vcvt.s32.f32 %v454
    %v471 = vcvt.s32.f32 %v455
    %v472 = vcvt.s32.f32 %v456
    %v473 = vcvt.s32.f32 %v457
    %v474 = vcvt.s32.f32 %v458
    %v475 = vcvt.s32.f32 %v459
    %v476 = vcvt.s32.f32 %v460
    %v477 = vcvt.s32.f32 %v461
    %v478 = vcvt.s32.f32 %v462
    %v479 = vcvt.s32.f32 %v463
    %481 = vset.pattern.permute.xlu0 0
    %482 = vperm.xlu0 %481, %v464
    %v483 = vpop.permute.xlu0 %482
    %486 = vset.pattern.permute.xlu0 0
    %487 = vperm.xlu0 %486, %v465
    %v488 = vpop.permute.xlu0 %487
    %491 = vset.pattern.permute.xlu0 0
    %492 = vperm.xlu0 %491, %v466
    %v493 = vpop.permute.xlu0 %492
    %496 = vset.pattern.permute.xlu0 0
    %497 = vperm.xlu0 %496, %v467
    %v498 = vpop.permute.xlu0 %497
    %501 = vset.pattern.permute.xlu0 0
    %502 = vperm.xlu0 %501, %v468
    %v503 = vpop.permute.xlu0 %502
    %506 = vset.pattern.permute.xlu0 0
    %507 = vperm.xlu0 %506, %v469
    %v508 = vpop.permute.xlu0 %507
    %511 = vset.pattern.permute.xlu0 0
    %512 = vperm.xlu0 %511, %v470
    %v513 = vpop.permute.xlu0 %512
    %516 = vset.pattern.permute.xlu0 0
    %517 = vperm.xlu0 %516, %v471
    %v518 = vpop.permute.xlu0 %517
    %521 = vset.pattern.permute.xlu0 0
    %522 = vperm.xlu0 %521, %v472
    %v523 = vpop.permute.xlu0 %522
    %526 = vset.pattern.permute.xlu0 0
    %527 = vperm.xlu0 %526, %v473
    %v528 = vpop.permute.xlu0 %527
    %531 = vset.pattern.permute.xlu0 0
    %532 = vperm.xlu0 %531, %v474
    %v533 = vpop.permute.xlu0 %532
    %536 = vset.pattern.permute.xlu0 0
    %537 = vperm.xlu0 %536, %v475
    %v538 = vpop.permute.xlu0 %537
    %541 = vset.pattern.permute.xlu0 0
    %542 = vperm.xlu0 %541, %v476
    %v543 = vpop.permute.xlu0 %542
    %546 = vset.pattern.permute.xlu0 0
    %547 = vperm.xlu0 %546, %v477
    %v548 = vpop.permute.xlu0 %547
    %551 = vset.pattern.permute.xlu0 0
    %552 = vperm.xlu0 %551, %v478
    %v553 = vpop.permute.xlu0 %552
    %556 = vset.pattern.permute.xlu0 0
    %557 = vperm.xlu0 %556, %v479
    %v558 = vpop.permute.xlu0 %557
    %v560 = vmul.f32 %v400, %v483
    %v561 = vmul.f32 %v401, %v488
    %v562 = vmul.f32 %v402, %v493
    %v563 = vmul.f32 %v403, %v498
    %v564 = vmul.f32 %v404, %v503
    %v565 = vmul.f32 %v405, %v508
    %v566 = vmul.f32 %v406, %v513
    %v567 = vmul.f32 %v407, %v518
    %v568 = vmul.f32 %v408, %v523
    %v569 = vmul.f32 %v409, %v528
    %v570 = vmul.f32 %v410, %v533
    %v571 = vmul.f32 %v411, %v538
    %v572 = vmul.f32 %v412, %v543
    %v573 = vmul.f32 %v413, %v548
    %v574 = vmul.f32 %v414, %v553
    %v575 = vmul.f32 %v415, %v558
    %v576 = vmax.f32 %v560, %v564
    %v577 = vmax.f32 %v561, %v565
    %v578 = vmax.f32 %v562, %v566
    %v579 = vmax.f32 %v563, %v567
    %v580 = vmax.f32 %v576, %v568
    %v581 = vmax.f32 %v577, %v569
    %v582 = vmax.f32 %v578, %v570
    %v583 = vmax.f32 %v579, %v571
    %v584 = vmax.f32 %v580, %v572
    %v585 = vmax.f32 %v581, %v573
    %v586 = vmax.f32 %v582, %v574
    %v587 = vmax.f32 %v583, %v575
    %v588 = vmax.f32 %v584, %v585
    %v589 = vmax.f32 %v586, %v587
    %v590 = vmax.f32 %v588, %v589
    %v591 = vrot.slane %v590, 4
    %v592 = vmax.f32 %v590, %v591
    %v593 = vrot.slane %v592, 2
    %v594 = vmax.f32 %v592, %v593
    %v595 = vrot.slane %v594, 1
    %v596 = vmax.f32 %v594, %v595
    %v597 = vld [vmem:[#allocation2] sm:$0x1]
    %v598 = vmax.f32 %v597, %v596
    %599 = vst [vmem:[#allocation2] sm:$0x1] %v598
    %vm600 = vcmp.eq.s32.totalorder %v416, 1
    %vm601 = vcmp.eq.s32.totalorder %v417, 1
    %vm602 = vcmp.eq.s32.totalorder %v418, 1
    %vm603 = vcmp.eq.s32.totalorder %v419, 1
    %vm604 = vcmp.eq.s32.totalorder %v420, 1
    %vm605 = vcmp.eq.s32.totalorder %v421, 1
    %vm606 = vcmp.eq.s32.totalorder %v422, 1
    %vm607 = vcmp.eq.s32.totalorder %v423, 1
    %vm608 = vcmp.eq.s32.totalorder %v424, 1
    %vm609 = vcmp.eq.s32.totalorder %v425, 1
    %vm610 = vcmp.eq.s32.totalorder %v426, 1
    %vm611 = vcmp.eq.s32.totalorder %v427, 1
    %vm612 = vcmp.eq.s32.totalorder %v428, 1
    %vm613 = vcmp.eq.s32.totalorder %v429, 1
    %vm614 = vcmp.eq.s32.totalorder %v430, 1
    %vm615 = vcmp.eq.s32.totalorder %v431, 1
    %v616 = vsel %vm600, 1, 0
    %v617 = vsel %vm601, 1, 0
    %v618 = vsel %vm602, 1, 0
    %v619 = vsel %vm603, 1, 0
    %v620 = vsel %vm604, 1, 0
    %v621 = vsel %vm605, 1, 0
    %v622 = vsel %vm606, 1, 0
    %v623 = vsel %vm607, 1, 0
    %v624 = vsel %vm608, 1, 0
    %v625 = vsel %vm609, 1, 0
    %v626 = vsel %vm610, 1, 0
    %v627 = vsel %vm611, 1, 0
    %v628 = vsel %vm612, 1, 0
    %v629 = vsel %vm613, 1, 0
    %v630 = vsel %vm614, 1, 0
    %v631 = vsel %vm615, 1, 0
    %v632 = vcvt.s32.f32 %v616
    %v633 = vcvt.s32.f32 %v617
    %v634 = vcvt.s32.f32 %v618
    %v635 = vcvt.s32.f32 %v619
    %v636 = vcvt.s32.f32 %v620
    %v637 = vcvt.s32.f32 %v621
    %v638 = vcvt.s32.f32 %v622
    %v639 = vcvt.s32.f32 %v623
    %v640 = vcvt.s32.f32 %v624
    %v641 = vcvt.s32.f32 %v625
    %v642 = vcvt.s32.f32 %v626
    %v643 = vcvt.s32.f32 %v627
    %v644 = vcvt.s32.f32 %v628
    %v645 = vcvt.s32.f32 %v629
    %v646 = vcvt.s32.f32 %v630
    %v647 = vcvt.s32.f32 %v631
    %649 = vset.pattern.permute.xlu0 0
    %650 = vperm.xlu0 %649, %v632
    %v651 = vpop.permute.xlu0 %650
    %654 = vset.pattern.permute.xlu0 0
    %655 = vperm.xlu0 %654, %v633
    %v656 = vpop.permute.xlu0 %655
    %659 = vset.pattern.permute.xlu0 0
    %660 = vperm.xlu0 %659, %v634
    %v661 = vpop.permute.xlu0 %660
    %664 = vset.pattern.permute.xlu0 0
    %665 = vperm.xlu0 %664, %v635
    %v666 = vpop.permute.xlu0 %665
    %669 = vset.pattern.permute.xlu0 0
    %670 = vperm.xlu0 %669, %v636
    %v671 = vpop.permute.xlu0 %670
    %674 = vset.pattern.permute.xlu0 0
    %675 = vperm.xlu0 %674, %v637
    %v676 = vpop.permute.xlu0 %675
    %679 = vset.pattern.permute.xlu0 0
    %680 = vperm.xlu0 %679, %v638
    %v681 = vpop.permute.xlu0 %680
    %684 = vset.pattern.permute.xlu0 0
    %685 = vperm.xlu0 %684, %v639
    %v686 = vpop.permute.xlu0 %685
    %689 = vset.pattern.permute.xlu0 0
    %690 = vperm.xlu0 %689, %v640
    %v691 = vpop.permute.xlu0 %690
    %694 = vset.pattern.permute.xlu0 0
    %695 = vperm.xlu0 %694, %v641
    %v696 = vpop.permute.xlu0 %695
    %699 = vset.pattern.permute.xlu0 0
    %700 = vperm.xlu0 %699, %v642
    %v701 = vpop.permute.xlu0 %700
    %704 = vset.pattern.permute.xlu0 0
    %705 = vperm.xlu0 %704, %v643
    %v706 = vpop.permute.xlu0 %705
    %709 = vset.pattern.permute.xlu0 0
    %710 = vperm.xlu0 %709, %v644
    %v711 = vpop.permute.xlu0 %710
    %714 = vset.pattern.permute.xlu0 0
    %715 = vperm.xlu0 %714, %v645
    %v716 = vpop.permute.xlu0 %715
    %719 = vset.pattern.permute.xlu0 0
    %720 = vperm.xlu0 %719, %v646
    %v721 = vpop.permute.xlu0 %720
    %724 = vset.pattern.permute.xlu0 0
    %725 = vperm.xlu0 %724, %v647
    %v726 = vpop.permute.xlu0 %725
    %v728 = vmul.f32 %v400, %v651
    %v729 = vmul.f32 %v401, %v656
    %v730 = vmul.f32 %v402, %v661
    %v731 = vmul.f32 %v403, %v666
    %v732 = vmul.f32 %v404, %v671
    %v733 = vmul.f32 %v405, %v676
    %v734 = vmul.f32 %v406, %v681
    %v735 = vmul.f32 %v407, %v686
    %v736 = vmul.f32 %v408, %v691
    %v737 = vmul.f32 %v409, %v696
    %v738 = vmul.f32 %v410, %v701
    %v739 = vmul.f32 %v411, %v706
    %v740 = vmul.f32 %v412, %v711
    %v741 = vmul.f32 %v413, %v716
    %v742 = vmul.f32 %v414, %v721
    %v743 = vmul.f32 %v415, %v726
    %v744 = vmax.f32 %v728, %v732
    %v745 = vmax.f32 %v729, %v733
    %v746 = vmax.f32 %v730, %v734
    %v747 = vmax.f32 %v731, %v735
    %v748 = vmax.f32 %v744, %v736
    %v749 = vmax.f32 %v745, %v737
    %v750 = vmax.f32 %v746, %v738
    %v751 = vmax.f32 %v747, %v739
    %v752 = vmax.f32 %v748, %v740
    %v753 = vmax.f32 %v749, %v741
    %v754 = vmax.f32 %v750, %v742
    %v755 = vmax.f32 %v751, %v743
    %v756 = vmax.f32 %v752, %v753
    %v757 = vmax.f32 %v754, %v755
    %v758 = vmax.f32 %v756, %v757
    %v759 = vrot.slane %v758, 4
    %v760 = vmax.f32 %v758, %v759
    %v761 = vrot.slane %v760, 2
    %v762 = vmax.f32 %v760, %v761
    %v763 = vrot.slane %v762, 1
    %v764 = vmax.f32 %v762, %v763
    %v765 = vld [vmem:[#allocation2 + $0x1] sm:$0x1]
    %v766 = vmax.f32 %v765, %v764
    %767 = vst [vmem:[#allocation2 + $0x1] sm:$0x1] %v766
    %vm768 = vcmp.eq.s32.totalorder %v416, 2
    %vm769 = vcmp.eq.s32.totalorder %v417, 2
    %vm770 = vcmp.eq.s32.totalorder %v418, 2
    %vm771 = vcmp.eq.s32.totalorder %v419, 2
    %vm772 = vcmp.eq.s32.totalorder %v420, 2
    %vm773 = vcmp.eq.s32.totalorder %v421, 2
    %vm774 = vcmp.eq.s32.totalorder %v422, 2
    %vm775 = vcmp.eq.s32.totalorder %v423, 2
    %vm776 = vcmp.eq.s32.totalorder %v424, 2
    %vm777 = vcmp.eq.s32.totalorder %v425, 2
    %vm778 = vcmp.eq.s32.totalorder %v426, 2
    %vm779 = vcmp.eq.s32.totalorder %v427, 2
    %vm780 = vcmp.eq.s32.totalorder %v428, 2
    %vm781 = vcmp.eq.s32.totalorder %v429, 2
    %vm782 = vcmp.eq.s32.totalorder %v430, 2
    %vm783 = vcmp.eq.s32.totalorder %v431, 2
    %v784 = vsel %vm768, 1, 0
    %v785 = vsel %vm769, 1, 0
    %v786 = vsel %vm770, 1, 0
    %v787 = vsel %vm771, 1, 0
    %v788 = vsel %vm772, 1, 0
    %v789 = vsel %vm773, 1, 0
    %v790 = vsel %vm774, 1, 0
    %v791 = vsel %vm775, 1, 0
    %v792 = vsel %vm776, 1, 0
    %v793 = vsel %vm777, 1, 0
    %v794 = vsel %vm778, 1, 0
    %v795 = vsel %vm779, 1, 0
    %v796 = vsel %vm780, 1, 0
    %v797 = vsel %vm781, 1, 0
    %v798 = vsel %vm782, 1, 0
    %v799 = vsel %vm783, 1, 0
    %v800 = vcvt.s32.f32 %v784
    %v801 = vcvt.s32.f32 %v785
    %v802 = vcvt.s32.f32 %v786
    %v803 = vcvt.s32.f32 %v787
    %v804 = vcvt.s32.f32 %v788
    %v805 = vcvt.s32.f32 %v789
    %v806 = vcvt.s32.f32 %v790
    %v807 = vcvt.s32.f32 %v791
    %v808 = vcvt.s32.f32 %v792
    %v809 = vcvt.s32.f32 %v793
    %v810 = vcvt.s32.f32 %v794
    %v811 = vcvt.s32.f32 %v795
    %v812 = vcvt.s32.f32 %v796
    %v813 = vcvt.s32.f32 %v797
    %v814 = vcvt.s32.f32 %v798
    %v815 = vcvt.s32.f32 %v799
    %817 = vset.pattern.permute.xlu0 0
    %818 = vperm.xlu0 %817, %v800
    %v819 = vpop.permute.xlu0 %818
    %822 = vset.pattern.permute.xlu0 0
    %823 = vperm.xlu0 %822, %v801
    %v824 = vpop.permute.xlu0 %823
    %827 = vset.pattern.permute.xlu0 0
    %828 = vperm.xlu0 %827, %v802
    %v829 = vpop.permute.xlu0 %828
    %832 = vset.pattern.permute.xlu0 0
    %833 = vperm.xlu0 %832, %v803
    %v834 = vpop.permute.xlu0 %833
    %837 = vset.pattern.permute.xlu0 0
    %838 = vperm.xlu0 %837, %v804
    %v839 = vpop.permute.xlu0 %838
    %842 = vset.pattern.permute.xlu0 0
    %843 = vperm.xlu0 %842, %v805
    %v844 = vpop.permute.xlu0 %843
    %847 = vset.pattern.permute.xlu0 0
    %848 = vperm.xlu0 %847, %v806
    %v849 = vpop.permute.xlu0 %848
    %852 = vset.pattern.permute.xlu0 0
    %853 = vperm.xlu0 %852, %v807
    %v854 = vpop.permute.xlu0 %853
    %857 = vset.pattern.permute.xlu0 0
    %858 = vperm.xlu0 %857, %v808
    %v859 = vpop.permute.xlu0 %858
    %862 = vset.pattern.permute.xlu0 0
    %863 = vperm.xlu0 %862, %v809
    %v864 = vpop.permute.xlu0 %863
    %867 = vset.pattern.permute.xlu0 0
    %868 = vperm.xlu0 %867, %v810
    %v869 = vpop.permute.xlu0 %868
    %872 = vset.pattern.permute.xlu0 0
    %873 = vperm.xlu0 %872, %v811
    %v874 = vpop.permute.xlu0 %873
    %877 = vset.pattern.permute.xlu0 0
    %878 = vperm.xlu0 %877, %v812
    %v879 = vpop.permute.xlu0 %878
    %882 = vset.pattern.permute.xlu0 0
    %883 = vperm.xlu0 %882, %v813
    %v884 = vpop.permute.xlu0 %883
    %887 = vset.pattern.permute.xlu0 0
    %888 = vperm.xlu0 %887, %v814
    %v889 = vpop.permute.xlu0 %888
    %892 = vset.pattern.permute.xlu0 0
    %893 = vperm.xlu0 %892, %v815
    %v894 = vpop.permute.xlu0 %893
    %v896 = vmul.f32 %v400, %v819
    %v897 = vmul.f32 %v401, %v824
    %v898 = vmul.f32 %v402, %v829
    %v899 = vmul.f32 %v403, %v834
    %v900 = vmul.f32 %v404, %v839
    %v901 = vmul.f32 %v405, %v844
    %v902 = vmul.f32 %v406, %v849
    %v903 = vmul.f32 %v407, %v854
    %v904 = vmul.f32 %v408, %v859
    %v905 = vmul.f32 %v409, %v864
    %v906 = vmul.f32 %v410, %v869
    %v907 = vmul.f32 %v411, %v874
    %v908 = vmul.f32 %v412, %v879
    %v909 = vmul.f32 %v413, %v884
    %v910 = vmul.f32 %v414, %v889
    %v911 = vmul.f32 %v415, %v894
    %v912 = vmax.f32 %v896, %v900
    %v913 = vmax.f32 %v897, %v901
    %v914 = vmax.f32 %v898, %v902
    %v915 = vmax.f32 %v899, %v903
    %v916 = vmax.f32 %v912, %v904
    %v917 = vmax.f32 %v913, %v905
    %v918 = vmax.f32 %v914, %v906
    %v919 = vmax.f32 %v915, %v907
    %v920 = vmax.f32 %v916, %v908
    %v921 = vmax.f32 %v917, %v909
    %v922 = vmax.f32 %v918, %v910
    %v923 = vmax.f32 %v919, %v911
    %v924 = vmax.f32 %v920, %v921
    %v925 = vmax.f32 %v922, %v923
    %v926 = vmax.f32 %v924, %v925
    %v927 = vrot.slane %v926, 4
    %v928 = vmax.f32 %v926, %v927
    %v929 = vrot.slane %v928, 2
    %v930 = vmax.f32 %v928, %v929
    %v931 = vrot.slane %v930, 1
    %v932 = vmax.f32 %v930, %v931
    %v933 = vld [vmem:[#allocation2 + $0x2] sm:$0x1]
    %v934 = vmax.f32 %v933, %v932
    %935 = vst [vmem:[#allocation2 + $0x2] sm:$0x1] %v934
    %vm936 = vcmp.eq.s32.totalorder %v416, 3
    %vm937 = vcmp.eq.s32.totalorder %v417, 3
    %vm938 = vcmp.eq.s32.totalorder %v418, 3
    %vm939 = vcmp.eq.s32.totalorder %v419, 3
    %vm940 = vcmp.eq.s32.totalorder %v420, 3
    %vm941 = vcmp.eq.s32.totalorder %v421, 3
    %vm942 = vcmp.eq.s32.totalorder %v422, 3
    %vm943 = vcmp.eq.s32.totalorder %v423, 3
    %vm944 = vcmp.eq.s32.totalorder %v424, 3
    %vm945 = vcmp.eq.s32.totalorder %v425, 3
    %vm946 = vcmp.eq.s32.totalorder %v426, 3
    %vm947 = vcmp.eq.s32.totalorder %v427, 3
    %vm948 = vcmp.eq.s32.totalorder %v428, 3
    %vm949 = vcmp.eq.s32.totalorder %v429, 3
    %vm950 = vcmp.eq.s32.totalorder %v430, 3
    %vm951 = vcmp.eq.s32.totalorder %v431, 3
    %v952 = vsel %vm936, 1, 0
    %v953 = vsel %vm937, 1, 0
    %v954 = vsel %vm938, 1, 0
    %v955 = vsel %vm939, 1, 0
    %v956 = vsel %vm940, 1, 0
    %v957 = vsel %vm941, 1, 0
    %v958 = vsel %vm942, 1, 0
    %v959 = vsel %vm943, 1, 0
    %v960 = vsel %vm944, 1, 0
    %v961 = vsel %vm945, 1, 0
    %v962 = vsel %vm946, 1, 0
    %v963 = vsel %vm947, 1, 0
    %v964 = vsel %vm948, 1, 0
    %v965 = vsel %vm949, 1, 0
    %v966 = vsel %vm950, 1, 0
    %v967 = vsel %vm951, 1, 0
    %v968 = vcvt.s32.f32 %v952
    %v969 = vcvt.s32.f32 %v953
    %v970 = vcvt.s32.f32 %v954
    %v971 = vcvt.s32.f32 %v955
    %v972 = vcvt.s32.f32 %v956
    %v973 = vcvt.s32.f32 %v957
    %v974 = vcvt.s32.f32 %v958
    %v975 = vcvt.s32.f32 %v959
    %v976 = vcvt.s32.f32 %v960
    %v977 = vcvt.s32.f32 %v961
    %v978 = vcvt.s32.f32 %v962
    %v979 = vcvt.s32.f32 %v963
    %v980 = vcvt.s32.f32 %v964
    %v981 = vcvt.s32.f32 %v965
    %v982 = vcvt.s32.f32 %v966
    %v983 = vcvt.s32.f32 %v967
    %985 = vset.pattern.permute.xlu0 0
    %986 = vperm.xlu0 %985, %v968
    %v987 = vpop.permute.xlu0 %986
    %990 = vset.pattern.permute.xlu0 0
    %991 = vperm.xlu0 %990, %v969
    %v992 = vpop.permute.xlu0 %991
    %995 = vset.pattern.permute.xlu0 0
    %996 = vperm.xlu0 %995, %v970
    %v997 = vpop.permute.xlu0 %996
    %1000 = vset.pattern.permute.xlu0 0
    %1001 = vperm.xlu0 %1000, %v971
    %v1002 = vpop.permute.xlu0 %1001
    %1005 = vset.pattern.permute.xlu0 0
    %1006 = vperm.xlu0 %1005, %v972
    %v1007 = vpop.permute.xlu0 %1006
    %1010 = vset.pattern.permute.xlu0 0
    %1011 = vperm.xlu0 %1010, %v973
    %v1012 = vpop.permute.xlu0 %1011
    %1015 = vset.pattern.permute.xlu0 0
    %1016 = vperm.xlu0 %1015, %v974
    %v1017 = vpop.permute.xlu0 %1016
    %1020 = vset.pattern.permute.xlu0 0
    %1021 = vperm.xlu0 %1020, %v975
    %v1022 = vpop.permute.xlu0 %1021
    %1025 = vset.pattern.permute.xlu0 0
    %1026 = vperm.xlu0 %1025, %v976
    %v1027 = vpop.permute.xlu0 %1026
    %1030 = vset.pattern.permute.xlu0 0
    %1031 = vperm.xlu0 %1030, %v977
    %v1032 = vpop.permute.xlu0 %1031
    %1035 = vset.pattern.permute.xlu0 0
    %1036 = vperm.xlu0 %1035, %v978
    %v1037 = vpop.permute.xlu0 %1036
    %1040 = vset.pattern.permute.xlu0 0
    %1041 = vperm.xlu0 %1040, %v979
    %v1042 = vpop.permute.xlu0 %1041
    %1045 = vset.pattern.permute.xlu0 0
    %1046 = vperm.xlu0 %1045, %v980
    %v1047 = vpop.permute.xlu0 %1046
    %1050 = vset.pattern.permute.xlu0 0
    %1051 = vperm.xlu0 %1050, %v981
    %v1052 = vpop.permute.xlu0 %1051
    %1055 = vset.pattern.permute.xlu0 0
    %1056 = vperm.xlu0 %1055, %v982
    %v1057 = vpop.permute.xlu0 %1056
    %1060 = vset.pattern.permute.xlu0 0
    %1061 = vperm.xlu0 %1060, %v983
    %v1062 = vpop.permute.xlu0 %1061
    %v1064 = vmul.f32 %v400, %v987
    %v1065 = vmul.f32 %v401, %v992
    %v1066 = vmul.f32 %v402, %v997
    %v1067 = vmul.f32 %v403, %v1002
    %v1068 = vmul.f32 %v404, %v1007
    %v1069 = vmul.f32 %v405, %v1012
    %v1070 = vmul.f32 %v406, %v1017
    %v1071 = vmul.f32 %v407, %v1022
    %v1072 = vmul.f32 %v408, %v1027
    %v1073 = vmul.f32 %v409, %v1032
    %v1074 = vmul.f32 %v410, %v1037
    %v1075 = vmul.f32 %v411, %v1042
    %v1076 = vmul.f32 %v412, %v1047
    %v1077 = vmul.f32 %v413, %v1052
    %v1078 = vmul.f32 %v414, %v1057
    %v1079 = vmul.f32 %v415, %v1062
    %v1080 = vmax.f32 %v1064, %v1068
    %v1081 = vmax.f32 %v1065, %v1069
    %v1082 = vmax.f32 %v1066, %v1070
    %v1083 = vmax.f32 %v1067, %v1071
    %v1084 = vmax.f32 %v1080, %v1072
    %v1085 = vmax.f32 %v1081, %v1073
    %v1086 = vmax.f32 %v1082, %v1074
    %v1087 = vmax.f32 %v1083, %v1075
    %v1088 = vmax.f32 %v1084, %v1076
    %v1089 = vmax.f32 %v1085, %v1077
    %v1090 = vmax.f32 %v1086, %v1078
    %v1091 = vmax.f32 %v1087, %v1079
    %v1092 = vmax.f32 %v1088, %v1089
    %v1093 = vmax.f32 %v1090, %v1091
    %v1094 = vmax.f32 %v1092, %v1093
    %v1095 = vrot.slane %v1094, 4
    %v1096 = vmax.f32 %v1094, %v1095
    %v1097 = vrot.slane %v1096, 2
    %v1098 = vmax.f32 %v1096, %v1097
    %v1099 = vrot.slane %v1098, 1
    %v1100 = vmax.f32 %v1098, %v1099
    %v1101 = vld [vmem:[#allocation2 + $0x3] sm:$0x1]
    %v1102 = vmax.f32 %v1101, %v1100
    %1103 = vst [vmem:[#allocation2 + $0x3] sm:$0x1] %v1102
    %vm1104 = vcmp.eq.s32.totalorder %v416, 4
    %vm1105 = vcmp.eq.s32.totalorder %v417, 4
    %vm1106 = vcmp.eq.s32.totalorder %v418, 4
    %vm1107 = vcmp.eq.s32.totalorder %v419, 4
    %vm1108 = vcmp.eq.s32.totalorder %v420, 4
    %vm1109 = vcmp.eq.s32.totalorder %v421, 4
    %vm1110 = vcmp.eq.s32.totalorder %v422, 4
    %vm1111 = vcmp.eq.s32.totalorder %v423, 4
    %vm1112 = vcmp.eq.s32.totalorder %v424, 4
    %vm1113 = vcmp.eq.s32.totalorder %v425, 4
    %vm1114 = vcmp.eq.s32.totalorder %v426, 4
    %vm1115 = vcmp.eq.s32.totalorder %v427, 4
    %vm1116 = vcmp.eq.s32.totalorder %v428, 4
    %vm1117 = vcmp.eq.s32.totalorder %v429, 4
    %vm1118 = vcmp.eq.s32.totalorder %v430, 4
    %vm1119 = vcmp.eq.s32.totalorder %v431, 4
    %v1120 = vsel %vm1104, 1, 0
    %v1121 = vsel %vm1105, 1, 0
    %v1122 = vsel %vm1106, 1, 0
    %v1123 = vsel %vm1107, 1, 0
    %v1124 = vsel %vm1108, 1, 0
    %v1125 = vsel %vm1109, 1, 0
    %v1126 = vsel %vm1110, 1, 0
    %v1127 = vsel %vm1111, 1, 0
    %v1128 = vsel %vm1112, 1, 0
    %v1129 = vsel %vm1113, 1, 0
    %v1130 = vsel %vm1114, 1, 0
    %v1131 = vsel %vm1115, 1, 0
    %v1132 = vsel %vm1116, 1, 0
    %v1133 = vsel %vm1117, 1, 0
    %v1134 = vsel %vm1118, 1, 0
    %v1135 = vsel %vm1119, 1, 0
    %v1136 = vcvt.s32.f32 %v1120
    %v1137 = vcvt.s32.f32 %v1121
    %v1138 = vcvt.s32.f32 %v1122
    %v1139 = vcvt.s32.f32 %v1123
    %v1140 = vcvt.s32.f32 %v1124
    %v1141 = vcvt.s32.f32 %v1125
    %v1142 = vcvt.s32.f32 %v1126
    %v1143 = vcvt.s32.f32 %v1127
    %v1144 = vcvt.s32.f32 %v1128
    %v1145 = vcvt.s32.f32 %v1129
    %v1146 = vcvt.s32.f32 %v1130
    %v1147 = vcvt.s32.f32 %v1131
    %v1148 = vcvt.s32.f32 %v1132
    %v1149 = vcvt.s32.f32 %v1133
    %v1150 = vcvt.s32.f32 %v1134
    %v1151 = vcvt.s32.f32 %v1135
    %1153 = vset.pattern.permute.xlu0 0
    %1154 = vperm.xlu0 %1153, %v1136
    %v1155 = vpop.permute.xlu0 %1154
    %1158 = vset.pattern.permute.xlu0 0
    %1159 = vperm.xlu0 %1158, %v1137
    %v1160 = vpop.permute.xlu0 %1159
    %1163 = vset.pattern.permute.xlu0 0
    %1164 = vperm.xlu0 %1163, %v1138
    %v1165 = vpop.permute.xlu0 %1164
    %1168 = vset.pattern.permute.xlu0 0
    %1169 = vperm.xlu0 %1168, %v1139
    %v1170 = vpop.permute.xlu0 %1169
    %1173 = vset.pattern.permute.xlu0 0
    %1174 = vperm.xlu0 %1173, %v1140
    %v1175 = vpop.permute.xlu0 %1174
    %1178 = vset.pattern.permute.xlu0 0
    %1179 = vperm.xlu0 %1178, %v1141
    %v1180 = vpop.permute.xlu0 %1179
    %1183 = vset.pattern.permute.xlu0 0
    %1184 = vperm.xlu0 %1183, %v1142
    %v1185 = vpop.permute.xlu0 %1184
    %1188 = vset.pattern.permute.xlu0 0
    %1189 = vperm.xlu0 %1188, %v1143
    %v1190 = vpop.permute.xlu0 %1189
    %1193 = vset.pattern.permute.xlu0 0
    %1194 = vperm.xlu0 %1193, %v1144
    %v1195 = vpop.permute.xlu0 %1194
    %1198 = vset.pattern.permute.xlu0 0
    %1199 = vperm.xlu0 %1198, %v1145
    %v1200 = vpop.permute.xlu0 %1199
    %1203 = vset.pattern.permute.xlu0 0
    %1204 = vperm.xlu0 %1203, %v1146
    %v1205 = vpop.permute.xlu0 %1204
    %1208 = vset.pattern.permute.xlu0 0
    %1209 = vperm.xlu0 %1208, %v1147
    %v1210 = vpop.permute.xlu0 %1209
    %1213 = vset.pattern.permute.xlu0 0
    %1214 = vperm.xlu0 %1213, %v1148
    %v1215 = vpop.permute.xlu0 %1214
    %1218 = vset.pattern.permute.xlu0 0
    %1219 = vperm.xlu0 %1218, %v1149
    %v1220 = vpop.permute.xlu0 %1219
    %1223 = vset.pattern.permute.xlu0 0
    %1224 = vperm.xlu0 %1223, %v1150
    %v1225 = vpop.permute.xlu0 %1224
    %1228 = vset.pattern.permute.xlu0 0
    %1229 = vperm.xlu0 %1228, %v1151
    %v1230 = vpop.permute.xlu0 %1229
    %v1232 = vmul.f32 %v400, %v1155
    %v1233 = vmul.f32 %v401, %v1160
    %v1234 = vmul.f32 %v402, %v1165
    %v1235 = vmul.f32 %v403, %v1170
    %v1236 = vmul.f32 %v404, %v1175
    %v1237 = vmul.f32 %v405, %v1180
    %v1238 = vmul.f32 %v406, %v1185
    %v1239 = vmul.f32 %v407, %v1190
    %v1240 = vmul.f32 %v408, %v1195
    %v1241 = vmul.f32 %v409, %v1200
    %v1242 = vmul.f32 %v410, %v1205
    %v1243 = vmul.f32 %v411, %v1210
    %v1244 = vmul.f32 %v412, %v1215
    %v1245 = vmul.f32 %v413, %v1220
    %v1246 = vmul.f32 %v414, %v1225
    %v1247 = vmul.f32 %v415, %v1230
    %v1248 = vmax.f32 %v1232, %v1236
    %v1249 = vmax.f32 %v1233, %v1237
    %v1250 = vmax.f32 %v1234, %v1238
    %v1251 = vmax.f32 %v1235, %v1239
    %v1252 = vmax.f32 %v1248, %v1240
    %v1253 = vmax.f32 %v1249, %v1241
    %v1254 = vmax.f32 %v1250, %v1242
    %v1255 = vmax.f32 %v1251, %v1243
    %v1256 = vmax.f32 %v1252, %v1244
    %v1257 = vmax.f32 %v1253, %v1245
    %v1258 = vmax.f32 %v1254, %v1246
    %v1259 = vmax.f32 %v1255, %v1247
    %v1260 = vmax.f32 %v1256, %v1257
    %v1261 = vmax.f32 %v1258, %v1259
    %v1262 = vmax.f32 %v1260, %v1261
    %v1263 = vrot.slane %v1262, 4
    %v1264 = vmax.f32 %v1262, %v1263
    %v1265 = vrot.slane %v1264, 2
    %v1266 = vmax.f32 %v1264, %v1265
    %v1267 = vrot.slane %v1266, 1
    %v1268 = vmax.f32 %v1266, %v1267
    %v1269 = vld [vmem:[#allocation2 + $0x4] sm:$0x1]
    %v1270 = vmax.f32 %v1269, %v1268
    %1271 = vst [vmem:[#allocation2 + $0x4] sm:$0x1] %v1270
    %vm1272 = vcmp.eq.s32.totalorder %v416, 5
    %vm1273 = vcmp.eq.s32.totalorder %v417, 5
    %vm1274 = vcmp.eq.s32.totalorder %v418, 5
    %vm1275 = vcmp.eq.s32.totalorder %v419, 5
    %vm1276 = vcmp.eq.s32.totalorder %v420, 5
    %vm1277 = vcmp.eq.s32.totalorder %v421, 5
    %vm1278 = vcmp.eq.s32.totalorder %v422, 5
    %vm1279 = vcmp.eq.s32.totalorder %v423, 5
    %vm1280 = vcmp.eq.s32.totalorder %v424, 5
    %vm1281 = vcmp.eq.s32.totalorder %v425, 5
    %vm1282 = vcmp.eq.s32.totalorder %v426, 5
    %vm1283 = vcmp.eq.s32.totalorder %v427, 5
    %vm1284 = vcmp.eq.s32.totalorder %v428, 5
    %vm1285 = vcmp.eq.s32.totalorder %v429, 5
    %vm1286 = vcmp.eq.s32.totalorder %v430, 5
    %vm1287 = vcmp.eq.s32.totalorder %v431, 5
    %v1288 = vsel %vm1272, 1, 0
    %v1289 = vsel %vm1273, 1, 0
    %v1290 = vsel %vm1274, 1, 0
    %v1291 = vsel %vm1275, 1, 0
    %v1292 = vsel %vm1276, 1, 0
    %v1293 = vsel %vm1277, 1, 0
    %v1294 = vsel %vm1278, 1, 0
    %v1295 = vsel %vm1279, 1, 0
    %v1296 = vsel %vm1280, 1, 0
    %v1297 = vsel %vm1281, 1, 0
    %v1298 = vsel %vm1282, 1, 0
    %v1299 = vsel %vm1283, 1, 0
    %v1300 = vsel %vm1284, 1, 0
    %v1301 = vsel %vm1285, 1, 0
    %v1302 = vsel %vm1286, 1, 0
    %v1303 = vsel %vm1287, 1, 0
    %v1304 = vcvt.s32.f32 %v1288
    %v1305 = vcvt.s32.f32 %v1289
    %v1306 = vcvt.s32.f32 %v1290
    %v1307 = vcvt.s32.f32 %v1291
    %v1308 = vcvt.s32.f32 %v1292
    %v1309 = vcvt.s32.f32 %v1293
    %v1310 = vcvt.s32.f32 %v1294
    %v1311 = vcvt.s32.f32 %v1295
    %v1312 = vcvt.s32.f32 %v1296
    %v1313 = vcvt.s32.f32 %v1297
    %v1314 = vcvt.s32.f32 %v1298
    %v1315 = vcvt.s32.f32 %v1299
    %v1316 = vcvt.s32.f32 %v1300
    %v1317 = vcvt.s32.f32 %v1301
    %v1318 = vcvt.s32.f32 %v1302
    %v1319 = vcvt.s32.f32 %v1303
    %1321 = vset.pattern.permute.xlu0 0
    %1322 = vperm.xlu0 %1321, %v1304
    %v1323 = vpop.permute.xlu0 %1322
    %1326 = vset.pattern.permute.xlu0 0
    %1327 = vperm.xlu0 %1326, %v1305
    %v1328 = vpop.permute.xlu0 %1327
    %1331 = vset.pattern.permute.xlu0 0
    %1332 = vperm.xlu0 %1331, %v1306
    %v1333 = vpop.permute.xlu0 %1332
    %1336 = vset.pattern.permute.xlu0 0
    %1337 = vperm.xlu0 %1336, %v1307
    %v1338 = vpop.permute.xlu0 %1337
    %1341 = vset.pattern.permute.xlu0 0
    %1342 = vperm.xlu0 %1341, %v1308
    %v1343 = vpop.permute.xlu0 %1342
    %1346 = vset.pattern.permute.xlu0 0
    %1347 = vperm.xlu0 %1346, %v1309
    %v1348 = vpop.permute.xlu0 %1347
    %1351 = vset.pattern.permute.xlu0 0
    %1352 = vperm.xlu0 %1351, %v1310
    %v1353 = vpop.permute.xlu0 %1352
    %1356 = vset.pattern.permute.xlu0 0
    %1357 = vperm.xlu0 %1356, %v1311
    %v1358 = vpop.permute.xlu0 %1357
    %1361 = vset.pattern.permute.xlu0 0
    %1362 = vperm.xlu0 %1361, %v1312
    %v1363 = vpop.permute.xlu0 %1362
    %1366 = vset.pattern.permute.xlu0 0
    %1367 = vperm.xlu0 %1366, %v1313
    %v1368 = vpop.permute.xlu0 %1367
    %1371 = vset.pattern.permute.xlu0 0
    %1372 = vperm.xlu0 %1371, %v1314
    %v1373 = vpop.permute.xlu0 %1372
    %1376 = vset.pattern.permute.xlu0 0
    %1377 = vperm.xlu0 %1376, %v1315
    %v1378 = vpop.permute.xlu0 %1377
    %1381 = vset.pattern.permute.xlu0 0
    %1382 = vperm.xlu0 %1381, %v1316
    %v1383 = vpop.permute.xlu0 %1382
    %1386 = vset.pattern.permute.xlu0 0
    %1387 = vperm.xlu0 %1386, %v1317
    %v1388 = vpop.permute.xlu0 %1387
    %1391 = vset.pattern.permute.xlu0 0
    %1392 = vperm.xlu0 %1391, %v1318
    %v1393 = vpop.permute.xlu0 %1392
    %1396 = vset.pattern.permute.xlu0 0
    %1397 = vperm.xlu0 %1396, %v1319
    %v1398 = vpop.permute.xlu0 %1397
    %v1400 = vmul.f32 %v400, %v1323
    %v1401 = vmul.f32 %v401, %v1328
    %v1402 = vmul.f32 %v402, %v1333
    %v1403 = vmul.f32 %v403, %v1338
    %v1404 = vmul.f32 %v404, %v1343
    %v1405 = vmul.f32 %v405, %v1348
    %v1406 = vmul.f32 %v406, %v1353
    %v1407 = vmul.f32 %v407, %v1358
    %v1408 = vmul.f32 %v408, %v1363
    %v1409 = vmul.f32 %v409, %v1368
    %v1410 = vmul.f32 %v410, %v1373
    %v1411 = vmul.f32 %v411, %v1378
    %v1412 = vmul.f32 %v412, %v1383
    %v1413 = vmul.f32 %v413, %v1388
    %v1414 = vmul.f32 %v414, %v1393
    %v1415 = vmul.f32 %v415, %v1398
    %v1416 = vmax.f32 %v1400, %v1404
    %v1417 = vmax.f32 %v1401, %v1405
    %v1418 = vmax.f32 %v1402, %v1406
    %v1419 = vmax.f32 %v1403, %v1407
    %v1420 = vmax.f32 %v1416, %v1408
    %v1421 = vmax.f32 %v1417, %v1409
    %v1422 = vmax.f32 %v1418, %v1410
    %v1423 = vmax.f32 %v1419, %v1411
    %v1424 = vmax.f32 %v1420, %v1412
    %v1425 = vmax.f32 %v1421, %v1413
    %v1426 = vmax.f32 %v1422, %v1414
    %v1427 = vmax.f32 %v1423, %v1415
    %v1428 = vmax.f32 %v1424, %v1425
    %v1429 = vmax.f32 %v1426, %v1427
    %v1430 = vmax.f32 %v1428, %v1429
    %v1431 = vrot.slane %v1430, 4
    %v1432 = vmax.f32 %v1430, %v1431
    %v1433 = vrot.slane %v1432, 2
    %v1434 = vmax.f32 %v1432, %v1433
    %v1435 = vrot.slane %v1434, 1
    %v1436 = vmax.f32 %v1434, %v1435
    %v1437 = vld [vmem:[#allocation2 + $0x5] sm:$0x1]
    %v1438 = vmax.f32 %v1437, %v1436
    %1439 = vst [vmem:[#allocation2 + $0x5] sm:$0x1] %v1438
    %vm1440 = vcmp.eq.s32.totalorder %v416, 6
    %vm1441 = vcmp.eq.s32.totalorder %v417, 6
    %vm1442 = vcmp.eq.s32.totalorder %v418, 6
    %vm1443 = vcmp.eq.s32.totalorder %v419, 6
    %vm1444 = vcmp.eq.s32.totalorder %v420, 6
    %vm1445 = vcmp.eq.s32.totalorder %v421, 6
    %vm1446 = vcmp.eq.s32.totalorder %v422, 6
    %vm1447 = vcmp.eq.s32.totalorder %v423, 6
    %vm1448 = vcmp.eq.s32.totalorder %v424, 6
    %vm1449 = vcmp.eq.s32.totalorder %v425, 6
    %vm1450 = vcmp.eq.s32.totalorder %v426, 6
    %vm1451 = vcmp.eq.s32.totalorder %v427, 6
    %vm1452 = vcmp.eq.s32.totalorder %v428, 6
    %vm1453 = vcmp.eq.s32.totalorder %v429, 6
    %vm1454 = vcmp.eq.s32.totalorder %v430, 6
    %vm1455 = vcmp.eq.s32.totalorder %v431, 6
    %v1456 = vsel %vm1440, 1, 0
    %v1457 = vsel %vm1441, 1, 0
    %v1458 = vsel %vm1442, 1, 0
    %v1459 = vsel %vm1443, 1, 0
    %v1460 = vsel %vm1444, 1, 0
    %v1461 = vsel %vm1445, 1, 0
    %v1462 = vsel %vm1446, 1, 0
    %v1463 = vsel %vm1447, 1, 0
    %v1464 = vsel %vm1448, 1, 0
    %v1465 = vsel %vm1449, 1, 0
    %v1466 = vsel %vm1450, 1, 0
    %v1467 = vsel %vm1451, 1, 0
    %v1468 = vsel %vm1452, 1, 0
    %v1469 = vsel %vm1453, 1, 0
    %v1470 = vsel %vm1454, 1, 0
    %v1471 = vsel %vm1455, 1, 0
    %v1472 = vcvt.s32.f32 %v1456
    %v1473 = vcvt.s32.f32 %v1457
    %v1474 = vcvt.s32.f32 %v1458
    %v1475 = vcvt.s32.f32 %v1459
    %v1476 = vcvt.s32.f32 %v1460
    %v1477 = vcvt.s32.f32 %v1461
    %v1478 = vcvt.s32.f32 %v1462
    %v1479 = vcvt.s32.f32 %v1463
    %v1480 = vcvt.s32.f32 %v1464
    %v1481 = vcvt.s32.f32 %v1465
    %v1482 = vcvt.s32.f32 %v1466
    %v1483 = vcvt.s32.f32 %v1467
    %v1484 = vcvt.s32.f32 %v1468
    %v1485 = vcvt.s32.f32 %v1469
    %v1486 = vcvt.s32.f32 %v1470
    %v1487 = vcvt.s32.f32 %v1471
    %1489 = vset.pattern.permute.xlu0 0
    %1490 = vperm.xlu0 %1489, %v1472
    %v1491 = vpop.permute.xlu0 %1490
    %1494 = vset.pattern.permute.xlu0 0
    %1495 = vperm.xlu0 %1494, %v1473
    %v1496 = vpop.permute.xlu0 %1495
    %1499 = vset.pattern.permute.xlu0 0
    %1500 = vperm.xlu0 %1499, %v1474
    %v1501 = vpop.permute.xlu0 %1500
    %1504 = vset.pattern.permute.xlu0 0
    %1505 = vperm.xlu0 %1504, %v1475
    %v1506 = vpop.permute.xlu0 %1505
    %1509 = vset.pattern.permute.xlu0 0
    %1510 = vperm.xlu0 %1509, %v1476
    %v1511 = vpop.permute.xlu0 %1510
    %1514 = vset.pattern.permute.xlu0 0
    %1515 = vperm.xlu0 %1514, %v1477
    %v1516 = vpop.permute.xlu0 %1515
    %1519 = vset.pattern.permute.xlu0 0
    %1520 = vperm.xlu0 %1519, %v1478
    %v1521 = vpop.permute.xlu0 %1520
    %1524 = vset.pattern.permute.xlu0 0
    %1525 = vperm.xlu0 %1524, %v1479
    %v1526 = vpop.permute.xlu0 %1525
    %1529 = vset.pattern.permute.xlu0 0
    %1530 = vperm.xlu0 %1529, %v1480
    %v1531 = vpop.permute.xlu0 %1530
    %1534 = vset.pattern.permute.xlu0 0
    %1535 = vperm.xlu0 %1534, %v1481
    %v1536 = vpop.permute.xlu0 %1535
    %1539 = vset.pattern.permute.xlu0 0
    %1540 = vperm.xlu0 %1539, %v1482
    %v1541 = vpop.permute.xlu0 %1540
    %1544 = vset.pattern.permute.xlu0 0
    %1545 = vperm.xlu0 %1544, %v1483
    %v1546 = vpop.permute.xlu0 %1545
    %1549 = vset.pattern.permute.xlu0 0
    %1550 = vperm.xlu0 %1549, %v1484
    %v1551 = vpop.permute.xlu0 %1550
    %1554 = vset.pattern.permute.xlu0 0
    %1555 = vperm.xlu0 %1554, %v1485
    %v1556 = vpop.permute.xlu0 %1555
    %1559 = vset.pattern.permute.xlu0 0
    %1560 = vperm.xlu0 %1559, %v1486
    %v1561 = vpop.permute.xlu0 %1560
    %1564 = vset.pattern.permute.xlu0 0
    %1565 = vperm.xlu0 %1564, %v1487
    %v1566 = vpop.permute.xlu0 %1565
    %v1568 = vmul.f32 %v400, %v1491
    %v1569 = vmul.f32 %v401, %v1496
    %v1570 = vmul.f32 %v402, %v1501
    %v1571 = vmul.f32 %v403, %v1506
    %v1572 = vmul.f32 %v404, %v1511
    %v1573 = vmul.f32 %v405, %v1516
    %v1574 = vmul.f32 %v406, %v1521
    %v1575 = vmul.f32 %v407, %v1526
    %v1576 = vmul.f32 %v408, %v1531
    %v1577 = vmul.f32 %v409, %v1536
    %v1578 = vmul.f32 %v410, %v1541
    %v1579 = vmul.f32 %v411, %v1546
    %v1580 = vmul.f32 %v412, %v1551
    %v1581 = vmul.f32 %v413, %v1556
    %v1582 = vmul.f32 %v414, %v1561
    %v1583 = vmul.f32 %v415, %v1566
    %v1584 = vmax.f32 %v1568, %v1572
    %v1585 = vmax.f32 %v1569, %v1573
    %v1586 = vmax.f32 %v1570, %v1574
    %v1587 = vmax.f32 %v1571, %v1575
    %v1588 = vmax.f32 %v1584, %v1576
    %v1589 = vmax.f32 %v1585, %v1577
    %v1590 = vmax.f32 %v1586, %v1578
    %v1591 = vmax.f32 %v1587, %v1579
    %v1592 = vmax.f32 %v1588, %v1580
    %v1593 = vmax.f32 %v1589, %v1581
    %v1594 = vmax.f32 %v1590, %v1582
    %v1595 = vmax.f32 %v1591, %v1583
    %v1596 = vmax.f32 %v1592, %v1593
    %v1597 = vmax.f32 %v1594, %v1595
    %v1598 = vmax.f32 %v1596, %v1597
    %v1599 = vrot.slane %v1598, 4
    %v1600 = vmax.f32 %v1598, %v1599
    %v1601 = vrot.slane %v1600, 2
    %v1602 = vmax.f32 %v1600, %v1601
    %v1603 = vrot.slane %v1602, 1
    %v1604 = vmax.f32 %v1602, %v1603
    %v1605 = vld [vmem:[#allocation2 + $0x6] sm:$0x1]
    %v1606 = vmax.f32 %v1605, %v1604
    %1607 = vst [vmem:[#allocation2 + $0x6] sm:$0x1] %v1606
    %vm1608 = vcmp.eq.s32.totalorder %v416, 7
    %vm1609 = vcmp.eq.s32.totalorder %v417, 7
    %vm1610 = vcmp.eq.s32.totalorder %v418, 7
    %vm1611 = vcmp.eq.s32.totalorder %v419, 7
    %vm1612 = vcmp.eq.s32.totalorder %v420, 7
    %vm1613 = vcmp.eq.s32.totalorder %v421, 7
    %vm1614 = vcmp.eq.s32.totalorder %v422, 7
    %vm1615 = vcmp.eq.s32.totalorder %v423, 7
    %vm1616 = vcmp.eq.s32.totalorder %v424, 7
    %vm1617 = vcmp.eq.s32.totalorder %v425, 7
    %vm1618 = vcmp.eq.s32.totalorder %v426, 7
    %vm1619 = vcmp.eq.s32.totalorder %v427, 7
    %vm1620 = vcmp.eq.s32.totalorder %v428, 7
    %vm1621 = vcmp.eq.s32.totalorder %v429, 7
    %vm1622 = vcmp.eq.s32.totalorder %v430, 7
    %vm1623 = vcmp.eq.s32.totalorder %v431, 7
    %v1624 = vsel %vm1608, 1, 0
    %v1625 = vsel %vm1609, 1, 0
    %v1626 = vsel %vm1610, 1, 0
    %v1627 = vsel %vm1611, 1, 0
    %v1628 = vsel %vm1612, 1, 0
    %v1629 = vsel %vm1613, 1, 0
    %v1630 = vsel %vm1614, 1, 0
    %v1631 = vsel %vm1615, 1, 0
    %v1632 = vsel %vm1616, 1, 0
    %v1633 = vsel %vm1617, 1, 0
    %v1634 = vsel %vm1618, 1, 0
    %v1635 = vsel %vm1619, 1, 0
    %v1636 = vsel %vm1620, 1, 0
    %v1637 = vsel %vm1621, 1, 0
    %v1638 = vsel %vm1622, 1, 0
    %v1639 = vsel %vm1623, 1, 0
    %v1640 = vcvt.s32.f32 %v1624
    %v1641 = vcvt.s32.f32 %v1625
    %v1642 = vcvt.s32.f32 %v1626
    %v1643 = vcvt.s32.f32 %v1627
    %v1644 = vcvt.s32.f32 %v1628
    %v1645 = vcvt.s32.f32 %v1629
    %v1646 = vcvt.s32.f32 %v1630
    %v1647 = vcvt.s32.f32 %v1631
    %v1648 = vcvt.s32.f32 %v1632
    %v1649 = vcvt.s32.f32 %v1633
    %v1650 = vcvt.s32.f32 %v1634
    %v1651 = vcvt.s32.f32 %v1635
    %v1652 = vcvt.s32.f32 %v1636
    %v1653 = vcvt.s32.f32 %v1637
    %v1654 = vcvt.s32.f32 %v1638
    %v1655 = vcvt.s32.f32 %v1639
    %1657 = vset.pattern.permute.xlu0 0
    %1658 = vperm.xlu0 %1657, %v1640
    %v1659 = vpop.permute.xlu0 %1658
    %1662 = vset.pattern.permute.xlu0 0
    %1663 = vperm.xlu0 %1662, %v1641
    %v1664 = vpop.permute.xlu0 %1663
    %1667 = vset.pattern.permute.xlu0 0
    %1668 = vperm.xlu0 %1667, %v1642
    %v1669 = vpop.permute.xlu0 %1668
    %1672 = vset.pattern.permute.xlu0 0
    %1673 = vperm.xlu0 %1672, %v1643
    %v1674 = vpop.permute.xlu0 %1673
    %1677 = vset.pattern.permute.xlu0 0
    %1678 = vperm.xlu0 %1677, %v1644
    %v1679 = vpop.permute.xlu0 %1678
    %1682 = vset.pattern.permute.xlu0 0
    %1683 = vperm.xlu0 %1682, %v1645
    %v1684 = vpop.permute.xlu0 %1683
    %1687 = vset.pattern.permute.xlu0 0
    %1688 = vperm.xlu0 %1687, %v1646
    %v1689 = vpop.permute.xlu0 %1688
    %1692 = vset.pattern.permute.xlu0 0
    %1693 = vperm.xlu0 %1692, %v1647
    %v1694 = vpop.permute.xlu0 %1693
    %1697 = vset.pattern.permute.xlu0 0
    %1698 = vperm.xlu0 %1697, %v1648
    %v1699 = vpop.permute.xlu0 %1698
    %1702 = vset.pattern.permute.xlu0 0
    %1703 = vperm.xlu0 %1702, %v1649
    %v1704 = vpop.permute.xlu0 %1703
    %1707 = vset.pattern.permute.xlu0 0
    %1708 = vperm.xlu0 %1707, %v1650
    %v1709 = vpop.permute.xlu0 %1708
    %1712 = vset.pattern.permute.xlu0 0
    %1713 = vperm.xlu0 %1712, %v1651
    %v1714 = vpop.permute.xlu0 %1713
    %1717 = vset.pattern.permute.xlu0 0
    %1718 = vperm.xlu0 %1717, %v1652
    %v1719 = vpop.permute.xlu0 %1718
    %1722 = vset.pattern.permute.xlu0 0
    %1723 = vperm.xlu0 %1722, %v1653
    %v1724 = vpop.permute.xlu0 %1723
    %1727 = vset.pattern.permute.xlu0 0
    %1728 = vperm.xlu0 %1727, %v1654
    %v1729 = vpop.permute.xlu0 %1728
    %1732 = vset.pattern.permute.xlu0 0
    %1733 = vperm.xlu0 %1732, %v1655
    %v1734 = vpop.permute.xlu0 %1733
    %v1736 = vmul.f32 %v400, %v1659
    %v1737 = vmul.f32 %v401, %v1664
    %v1738 = vmul.f32 %v402, %v1669
    %v1739 = vmul.f32 %v403, %v1674
    %v1740 = vmul.f32 %v404, %v1679
    %v1741 = vmul.f32 %v405, %v1684
    %v1742 = vmul.f32 %v406, %v1689
    %v1743 = vmul.f32 %v407, %v1694
    %v1744 = vmul.f32 %v408, %v1699
    %v1745 = vmul.f32 %v409, %v1704
    %v1746 = vmul.f32 %v410, %v1709
    %v1747 = vmul.f32 %v411, %v1714
    %v1748 = vmul.f32 %v412, %v1719
    %v1749 = vmul.f32 %v413, %v1724
    %v1750 = vmul.f32 %v414, %v1729
    %v1751 = vmul.f32 %v415, %v1734
    %v1752 = vmax.f32 %v1736, %v1740
    %v1753 = vmax.f32 %v1737, %v1741
    %v1754 = vmax.f32 %v1738, %v1742
    %v1755 = vmax.f32 %v1739, %v1743
    %v1756 = vmax.f32 %v1752, %v1744
    %v1757 = vmax.f32 %v1753, %v1745
    %v1758 = vmax.f32 %v1754, %v1746
    %v1759 = vmax.f32 %v1755, %v1747
    %v1760 = vmax.f32 %v1756, %v1748
    %v1761 = vmax.f32 %v1757, %v1749
    %v1762 = vmax.f32 %v1758, %v1750
    %v1763 = vmax.f32 %v1759, %v1751
    %v1764 = vmax.f32 %v1760, %v1761
    %v1765 = vmax.f32 %v1762, %v1763
    %v1766 = vmax.f32 %v1764, %v1765
    %v1767 = vrot.slane %v1766, 4
    %v1768 = vmax.f32 %v1766, %v1767
    %v1769 = vrot.slane %v1768, 2
    %v1770 = vmax.f32 %v1768, %v1769
    %v1771 = vrot.slane %v1770, 1
    %v1772 = vmax.f32 %v1770, %v1771
    %v1773 = vld [vmem:[#allocation2 + $0x7] sm:$0x1]
    %v1774 = vmax.f32 %v1773, %v1772
    %1775 = vst [vmem:[#allocation2 + $0x7] sm:$0x1] %v1774
    // Predicated region
    $region34: #{tpu_custom_call.1} parent=1 // pred_check
      %p1776 = pneg %p28
    $region35: #{tpu_custom_call.1} parent=1 // pred_check_branch
      %1778 = sbr.rel (%p1776) target = $region37
    $region36: #{tpu_custom_call.1} parent=1 // pred_region
      %v1779 = vld [vmem:[#allocation2] sm:$0xff]
      %v1780 = vld [vmem:[%s5] sm:$0xff]
      %v1781 = vld [vmem:[%s5 + $0x8] sm:$0xff]
      %v1782 = vld [vmem:[%s5 + $0x10] sm:$0xff]
      %v1783 = vld [vmem:[%s5 + $0x18] sm:$0xff]
      %v1784 = vld [vmem:[%s5 + $0x20] sm:$0xff]
      %v1785 = vld [vmem:[%s5 + $0x28] sm:$0xff]
      %v1786 = vld [vmem:[%s5 + $0x30] sm:$0xff]
      %v1787 = vld [vmem:[%s5 + $0x38] sm:$0xff]
      %v1788 = vld [vmem:[%s5 + $0x40] sm:$0xff]
      %v1789 = vld [vmem:[%s5 + $0x48] sm:$0xff]
      %v1790 = vld [vmem:[%s5 + $0x50] sm:$0xff]
      %v1791 = vld [vmem:[%s5 + $0x58] sm:$0xff]
      %v1792 = vld [vmem:[%s5 + $0x60] sm:$0xff]
      %v1793 = vld [vmem:[%s5 + $0x68] sm:$0xff]
      %v1794 = vld [vmem:[%s5 + $0x70] sm:$0xff]
      %v1795 = vld [vmem:[%s5 + $0x78] sm:$0xff]
      %v1796 = vld [vmem:[%s6] sm:$0x1]
      %v1798 = vlaneseq
      %v1799 = vshrl.u32 %v1798, 7
      %v1800 = vsub.s32 0, %v1799
      %v1801 = vrot.slane %v1796, %v1800
      %1803 = vmatprep.subr.mxu0 0.0
      %1804 = vmatpush1.msra.mxu0 %v1795
      %1805 = vmatprep.subr.mxu0 0.0
      %1806 = vmatpush1.msra.mxu0 %v1794
      %1807 = vmatprep.subr.mxu0 0.0
      %1808 = vmatpush1.msra.mxu0 %v1793
      %1809 = vmatprep.subr.mxu0 0.0
      %1810 = vmatpush1.msra.mxu0 %v1792
      %1811 = vmatprep.subr.mxu0 0.0
      %1812 = vmatpush1.msra.mxu0 %v1791
      %1813 = vmatprep.subr.mxu0 0.0
      %1814 = vmatpush1.msra.mxu0 %v1790
      %1815 = vmatprep.subr.mxu0 0.0
      %1816 = vmatpush1.msra.mxu0 %v1789
      %1817 = vmatprep.subr.mxu0 0.0
      %1818 = vmatpush1.msra.mxu0 %v1788
      %1819 = vmatprep.subr.mxu0 0.0
      %1820 = vmatpush1.msra.mxu0 %v1787
      %1821 = vmatprep.subr.mxu0 0.0
      %1822 = vmatpush1.msra.mxu0 %v1786
      %1823 = vmatprep.subr.mxu0 0.0
      %1824 = vmatpush1.msra.mxu0 %v1785
      %1825 = vmatprep.subr.mxu0 0.0
      %1826 = vmatpush1.msra.mxu0 %v1784
      %1827 = vmatprep.subr.mxu0 0.0
      %1828 = vmatpush1.msra.mxu0 %v1783
      %1829 = vmatprep.subr.mxu0 0.0
      %1830 = vmatpush1.msra.mxu0 %v1782
      %1831 = vmatprep.subr.mxu0 0.0
      %1832 = vmatpush1.msra.mxu0 %v1781
      %1833 = vmatprep.subr.mxu0 0.0
      %1834 = vmatpush1.msra.mxu0 %v1780
      %1835 = vmatprep.subr.mxu0 0.0
      %1836 = vmatpush2.msra.mxu0 0.0
      %1837 = vmatprep.subr.mxu0 0.0
      %1838 = vmatpush2.msra.mxu0 0.0
      %1839 = vmatprep.subr.mxu0 0.0
      %1840 = vmatpush2.msra.mxu0 0.0
      %1841 = vmatprep.subr.mxu0 0.0
      %1842 = vmatpush2.msra.mxu0 0.0
      %1843 = vmatprep.subr.mxu0 0.0
      %1844 = vmatpush2.msra.mxu0 0.0
      %1845 = vmatprep.subr.mxu0 0.0
      %1846 = vmatpush2.msra.mxu0 0.0
      %1847 = vmatprep.subr.mxu0 0.0
      %1848 = vmatpush2.msra.mxu0 0.0
      %1849 = vmatprep.subr.mxu0 0.0
      %1850 = vmatpush2.msra.mxu0 0.0
      %1851 = vmatprep.subr.mxu0 0.0
      %1852 = vmatpush2.msra.mxu0 0.0
      %1853 = vmatprep.subr.mxu0 0.0
      %1854 = vmatpush2.msra.mxu0 0.0
      %1855 = vmatprep.subr.mxu0 0.0
      %1856 = vmatpush2.msra.mxu0 0.0
      %1857 = vmatprep.subr.mxu0 0.0
      %1858 = vmatpush2.msra.mxu0 0.0
      %1859 = vmatprep.subr.mxu0 0.0
      %1860 = vmatpush2.msra.mxu0 0.0
      %1861 = vmatprep.subr.mxu0 0.0
      %1862 = vmatpush2.msra.mxu0 0.0
      %1863 = vmatprep.subr.mxu0 0.0
      %1864 = vmatpush2.msra.mxu0 0.0
      %1865 = vmatprep.subr.mxu0 0.0
      %1866 = vmatpush2.msra.mxu0 0.0
      %1867 = vmatprep.mubr.f32.mxu0 0.0
      %1868 = vmatmul.mubr.f32.gmra.mxu0 %v1779
      %v1869 = vpop.f32.mrf.mxu0
      %v1870 = vadd.f32 %v1801, %v1869
      %v1871 = vpop.f32.mrf.mxu0
      %1872 = vdwg.mxu0
      %1873 = vst [vmem:[#allocation3] sm:$0xff] %v1870
    $region37: #{tpu_custom_call.1} parent=1 // pred_fallthru
      _
    // Predicated region
    $region38: #{tpu_custom_call.1} parent=1 // pred_check
      _
    $region39: #{tpu_custom_call.1} parent=1 // pred_check_branch
      %1875 = sbr.rel (0) target = $region41
    $region40: #{tpu_custom_call.1} parent=1 // pred_region
      %s1877 = ssub.s32 128, 128
      %1878 = vsyncadd [#allocation4], %s1877
      %s1880 = sshll.u32 [#allocation3], 4
      %s1881 = int_to_ptr.vmem [resolvable:$true] %s1880
      %1883 = dma.vmem_to_hbm [thread:$0]  %s1881, 128, %s7, [#allocation4]
    $region41: #{tpu_custom_call.1} parent=1 // pred_fallthru
      _
    // Predicated region
    $region42: #{tpu_custom_call.1} parent=1 // pred_check
      _
    $region43: #{tpu_custom_call.1} parent=1 // pred_check_branch
      %1885 = sbr.rel (0) target = $region45
    $region44: #{tpu_custom_call.1} parent=1 // pred_region
      %1886 = dma.done [#allocation4], 128
    $region45: #{tpu_custom_call.1} parent=1 // pred_fallthru
      _
    %1887 = vsyncpa [#allocation4], 1

</llo_original>
